<compile_context>
chip_gen: v7x
topology: tpu7x:2x2x1
jax: 0.10.0
libtpu: 0.0.40
codegen_flags: <defaults>
</compile_context>

<pallas_src>
import math
import functools
import numpy as np
import jax
import jax.numpy as jnp
from jax.experimental import pallas as pl
from jax.experimental.pallas import tpu as pltpu

EPS = 1e-5                                # nn.LayerNorm default eps
_SQRT_2_OVER_PI = math.sqrt(2.0 / math.pi)


# ----------------------------------------------------------------------------
# in-kernel helpers
# ----------------------------------------------------------------------------
def _layernorm(x, gamma, beta):
    mean = jnp.mean(x, axis=-1, keepdims=True)
    var = jnp.mean((x - mean) ** 2, axis=-1, keepdims=True)
    return (x - mean) * jax.lax.rsqrt(var + EPS) * gamma + beta


def _gelu_tanh(x):
    # tanh-approx GELU lowers to the EUP (its own VLIW slot) instead of a long
    # dependent VPU erf polynomial.  |gelu_tanh - gelu_erf| < ~1e-3.
    return 0.5 * x * (1.0 + jnp.tanh(_SQRT_2_OVER_PI * (x + 0.044715 * x * x * x)))


def _mha(q, k, v, *, num_heads):
    """Multi-head softmax attention on full-lane [*, C] activations.

    Heads are static dh-wide lane slices.  Per-head outputs are concatenated
    back in-register (XLU lane shuffle) — no VMEM scratch, no 8-lane masked
    stores — so the caller's output projection sees one dense [n, C] operand.
    Softmax normalization is deferred to an EUP approximate reciprocal applied
    to the small [n, dh] head output.  MXU operands are bf16, f32 accumulate;
    the softmax itself stays in f32.  The q/k scale is pre-folded into wq.
    """
    bf16 = jnp.bfloat16
    n, c = q.shape
    dh = c // num_heads
    qb, kb, vb = q.astype(bf16), k.astype(bf16), v.astype(bf16)
    outs = []
    for h in range(num_heads):                     # static unroll, small head count
        sl = slice(h * dh, (h + 1) * dh)
        s = jax.lax.dot_general(qb[:, sl], kb[:, sl], (((1,), (1,)), ((), ())),
                                preferred_element_type=jnp.float32)        # [n, m]
        s = s - jnp.max(s, axis=-1, keepdims=True)
        p = jnp.exp(s)
        l = jnp.sum(p, axis=-1, keepdims=True)                             # [n, 1]
        o = jnp.dot(p.astype(bf16), vb[:, sl], preferred_element_type=jnp.float32)
        outs.append(o * pl.reciprocal(l, approx=True))                     # deferred norm
    return jnp.concatenate(outs, axis=-1)                                  # [n, C]


# ----------------------------------------------------------------------------
# fully fused MyBlock2 kernel (one grid step per batch element)
# ----------------------------------------------------------------------------
def _block_kernel(xg_ref, xa_ref, xsg_ref, xsa_ref,
                  g1_ref, be1_ref, wq_ref, wkv_ref, wp_ref, bp_ref,
                  g2_ref, be2_ref, w1_ref, b1m_ref, w2_ref, b2m_ref,
                  og_ref, oa_ref, *, num_heads, n_grid, alpha):
    f32 = jnp.float32
    bf16 = jnp.bfloat16
    C = wq_ref.shape[0]

    # residual inputs / LN1 operands (concat along sublanes inside the kernel —
    # one fat matmul for all query rows instead of two half-height dots)
    x = jnp.concatenate([xg_ref[0], xa_ref[0]], axis=0).astype(f32)        # [N, C]
    xs = jnp.concatenate([xsg_ref[0], xsa_ref[0]], axis=0).astype(f32)     # [Ns, C]

    g1 = g1_ref[...].astype(f32)
    b1 = be1_ref[...].astype(f32)
    xn = _layernorm(x, g1, b1)                    # tuple_forward(norm1, x)
    xsn = _layernorm(xs, g1, b1)                  # tuple_forward(norm1, x_source)

    # ---- fused projections: wq has the softmax scale folded in; wkv = [wk|wv]
    q_all = jnp.dot(xn.astype(bf16), wq_ref[...], preferred_element_type=f32)    # [N, C]
    kv_s = jnp.dot(xsn.astype(bf16), wkv_ref[...], preferred_element_type=f32)   # [Ns, 2C]

    bp = bp_ref[...].astype(f32)

    # ---- forward_grid: queries = normed grid tokens, source = normed x_source
    hg = _mha(q_all[:n_grid], kv_s[:, :C], kv_s[:, C:], num_heads=num_heads)
    y_grid = jnp.dot(hg.astype(bf16), wp_ref[...], preferred_element_type=f32) + bp   # [Ng, C]

    # ---- forward_ada: queries = normed ada tokens, source = y_grid (unscaled;
    # dim_out == dim so k2/v2 alias k/v and share the fused wkv weight)
    kv_a = jnp.dot(y_grid.astype(bf16), wkv_ref[...], preferred_element_type=f32)     # [Ng, 2C]
    ha = _mha(q_all[n_grid:], kv_a[:, :C], kv_a[:, C:], num_heads=num_heads)
    y_ada = jnp.dot(ha.astype(bf16), wp_ref[...], preferred_element_type=f32) + bp    # [Na, C]

    # ---- drop_path = Identity, tuple_times(alpha), residual (use_fc=False)
    x1 = x + alpha * jnp.concatenate([y_grid, y_ada], axis=0)                          # [N, C]

    # ---- LN2 + MLP (fc1 -> GELU -> fc2) + residual; alpha folded into w2/b2m
    x1n = _layernorm(x1, g2_ref[...].astype(f32), be2_ref[...].astype(f32))
    h = jnp.dot(x1n.astype(bf16), w1_ref[...], preferred_element_type=f32) \
        + b1m_ref[...].astype(f32)
    h = _gelu_tanh(h)
    out = x1 + jnp.dot(h.astype(bf16), w2_ref[...], preferred_element_type=f32) \
        + b2m_ref[...].astype(f32)

    # two dense, sublane-aligned output stores (one per output tensor)
    og_ref[0] = out[:n_grid].astype(og_ref.dtype)
    oa_ref[0] = out[n_grid:].astype(oa_ref.dtype)


# ----------------------------------------------------------------------------
# one-time parameter preparation (offline: fold scale/alpha, fuse kv, bf16 cast)
# ----------------------------------------------------------------------------
def prepare_block_params(p, *, num_heads, alpha):
    C = p["wq"].shape[0]
    scale = (C // num_heads) ** -0.5        # qk_scale=None -> head_dim ** -0.5
    bf16 = jnp.bfloat16
    return dict(
        g1=p["g1"], b1=p["b1"],
        wq_s=(p["wq"] * scale).astype(bf16),                          # scale folded into wq
        wkv=jnp.concatenate([p["wk"], p["wv"]], axis=1).astype(bf16), # fused [C, 2C]
        wp=p["wp"].astype(bf16),
        bp=p["bp"],
        g2=p["g2"], b2=p["b2"],
        w1=p["w1"].astype(bf16), b1m=p["b1m"],
        w2a=(p["w2"] * alpha).astype(bf16),                           # alpha folded into fc2
        b2ma=p["b2m"] * alpha,
    )


# ----------------------------------------------------------------------------
# MyBlock2.forward — everything happens inside a single pallas_call
# ----------------------------------------------------------------------------
def my_block2_forward(x_grid, x_ada, xs_grid, xs_ada, kp, *, num_heads, alpha):
    B, Ng, C = x_grid.shape
    Na = x_ada.shape[1]
    Nsg = xs_grid.shape[1]
    Nsa = xs_ada.shape[1]
    H = kp["w1"].shape[1]

    kern = functools.partial(_block_kernel, num_heads=num_heads,
                             n_grid=Ng, alpha=float(alpha))

    def tok(n):
        return pl.BlockSpec((1, n, C), lambda b: (b, 0, 0))

    def vec(d):
        return pl.BlockSpec((1, d), lambda b: (0, 0))

    def mat(r, c):
        return pl.BlockSpec((r, c), lambda b: (0, 0))

    out_grid, out_ada = pl.pallas_call(
        kern,
        out_shape=(jax.ShapeDtypeStruct((B, Ng, C), x_grid.dtype),
                   jax.ShapeDtypeStruct((B, Na, C), x_ada.dtype)),
        grid=(B,),
        in_specs=[tok(Ng), tok(Na), tok(Nsg), tok(Nsa),
                  vec(C), vec(C),
                  mat(C, C), mat(C, 2 * C), mat(C, C), vec(C),
                  vec(C), vec(C),
                  mat(C, H), vec(H), mat(H, C), vec(C)],
        out_specs=(pl.BlockSpec((1, Ng, C), lambda b: (b, 0, 0)),
                   pl.BlockSpec((1, Na, C), lambda b: (b, 0, 0))),
        compiler_params=pltpu.CompilerParams(
            # batch iterations are independent -> v7x megacore shards them
            dimension_semantics=("parallel",)),
    )(x_grid, x_ada, xs_grid, xs_ada,
      kp["g1"], kp["b1"], kp["wq_s"], kp["wkv"], kp["wp"], kp["bp"],
      kp["g2"], kp["b2"], kp["w1"], kp["b1m"], kp["w2a"], kp["b2ma"])
    return out_grid, out_ada


# ----------------------------------------------------------------------------
# Pure-JAX reference (erf-exact GELU, exact softmax, f32) for a sanity check
# ----------------------------------------------------------------------------
_HP = jax.lax.Precision.HIGHEST


def _ref_layernorm(x, g, b):
    mean = x.mean(-1, keepdims=True)
    var = ((x - mean) ** 2).mean(-1, keepdims=True)
    return (x - mean) / jnp.sqrt(var + EPS) * g + b


def _ref_attention(x, xs, wq, wk, wv, wp, bp, num_heads, scale):
    B, N, _ = x.shape
    Ns = xs.shape[1]
    D = wq.shape[1]
    dh = D // num_heads
    q = jnp.einsum("bnc,cd->bnd", x, wq, precision=_HP).reshape(B, N, num_heads, dh).transpose(0, 2, 1, 3)
    k = jnp.einsum("bnc,cd->bnd", xs, wk, precision=_HP).reshape(B, Ns, num_heads, dh).transpose(0, 2, 1, 3)
    v = jnp.einsum("bnc,cd->bnd", xs, wv, precision=_HP).reshape(B, Ns, num_heads, dh).transpose(0, 2, 1, 3)
    a = jnp.einsum("bhnd,bhmd->bhnm", q, k, precision=_HP) * scale
    a = jax.nn.softmax(a, axis=-1)
    o = jnp.einsum("bhnm,bhmd->bhnd", a, v, precision=_HP).transpose(0, 2, 1, 3).reshape(B, N, D)
    return jnp.einsum("bnd,de->bne", o, wp, precision=_HP) + bp


def _ref_mlp(x, w1, b1, w2, b2):
    h = jnp.einsum("bnc,ch->bnh", x, w1, precision=_HP) + b1
    h = jax.nn.gelu(h, approximate=False)          # erf-exact (PyTorch nn.GELU default)
    return jnp.einsum("bnh,hc->bnc", h, w2, precision=_HP) + b2


def ref_block2_forward(x_grid, x_ada, xs_grid, xs_ada, p, *, num_heads, alpha):
    n_grid = x_grid.shape[1]
    C = x_grid.shape[2]
    scale = (C // num_heads) ** -0.5
    x_cat = jnp.concatenate([x_grid, x_ada], axis=1)
    xs_cat = jnp.concatenate([xs_grid, xs_ada], axis=1)
    xn = _ref_layernorm(x_cat, p["g1"], p["b1"])
    xsn = _ref_layernorm(xs_cat, p["g1"], p["b1"])
    xg_n, xa_n = xn[:, :n_grid], xn[:, n_grid:]
    y_grid = _ref_attention(xg_n, xsn, p["wq"], p["wk"], p["wv"], p["wp"], p["bp"], num_heads, scale)
    y_ada = _ref_attention(xa_n, y_grid, p["wq"], p["wk"], p["wv"], p["wp"], p["bp"], num_heads, scale)
    xg = x_grid + alpha * y_grid
    xa = x_ada + alpha * y_ada
    x_cat2 = jnp.concatenate([xg, xa], axis=1)
    y2 = _ref_mlp(_ref_layernorm(x_cat2, p["g2"], p["b2"]), p["w1"], p["b1m"], p["w2"], p["b2m"])
    out = x_cat2 + alpha * y2
    return out[:, :n_grid], out[:, n_grid:]


# ----------------------------------------------------------------------------
if __name__ == "__main__":
    B, C, NUM_HEADS = 2, 32, 4          # dim = dim_out = 32, head_dim = 8
    N_GRID, N_ADA = 8, 8                # query tokens (grid / ada)
    NS_GRID, NS_ADA = 8, 8              # source tokens
    MLP_RATIO = 4.0
    HIDDEN = int(C * MLP_RATIO)
    ALPHA = 0.5
    f32 = jnp.float32

    key = jax.random.PRNGKey(0)
    ks = jax.random.split(key, 20)
    params = dict(
        g1=1.0 + 0.1 * jax.random.normal(ks[0], (1, C), f32),
        b1=0.02 * jax.random.normal(ks[1], (1, C), f32),
        wq=0.05 * jax.random.normal(ks[2], (C, C), f32),
        wk=0.05 * jax.random.normal(ks[3], (C, C), f32),
        wv=0.05 * jax.random.normal(ks[4], (C, C), f32),
        wp=0.05 * jax.random.normal(ks[5], (C, C), f32),
        bp=0.02 * jax.random.normal(ks[6], (1, C), f32),
        g2=1.0 + 0.1 * jax.random.normal(ks[7], (1, C), f32),
        b2=0.02 * jax.random.normal(ks[8], (1, C), f32),
        w1=0.05 * jax.random.normal(ks[9], (C, HIDDEN), f32),
        b1m=0.02 * jax.random.normal(ks[10], (1, HIDDEN), f32),
        w2=0.05 * jax.random.normal(ks[11], (HIDDEN, C), f32),
        b2m=0.02 * jax.random.normal(ks[12], (1, C), f32),
    )
    x_grid = jax.random.normal(ks[13], (B, N_GRID, C), f32)
    x_ada = jax.random.normal(ks[14], (B, N_ADA, C), f32)
    xs_grid = jax.random.normal(ks[15], (B, NS_GRID, C), f32)
    xs_ada = jax.random.normal(ks[16], (B, NS_ADA, C), f32)

    # one-time parameter prep (fold softmax scale & alpha, fuse kv, cast bf16)
    kparams = prepare_block_params(params, num_heads=NUM_HEADS, alpha=ALPHA)

    out_grid, out_ada = my_block2_forward(x_grid, x_ada, xs_grid, xs_ada, kparams,
                                          num_heads=NUM_HEADS, alpha=ALPHA)
    out_grid = jax.block_until_ready(out_grid)
    out_ada = jax.block_until_ready(out_ada)

    ref_grid, ref_ada = ref_block2_forward(x_grid, x_ada, xs_grid, xs_ada, params,
                                           num_heads=NUM_HEADS, alpha=ALPHA)
    assert np.allclose(np.asarray(out_grid), np.asarray(ref_grid), atol=2e-2, rtol=2e-2)
    assert np.allclose(np.asarray(out_ada), np.asarray(ref_ada), atol=2e-2, rtol=2e-2)

    print("KERNEL_OK")
</pallas_src>

<mosaic_0001>
module attributes {stable_mosaic.version = 11 : i64} {
  func.func @_block_kernel(%arg0: i32, %arg1: memref<1x8x32xf32, #tpu.memory_space<vmem>>, %arg2: memref<1x8x32xf32, #tpu.memory_space<vmem>>, %arg3: memref<1x8x32xf32, #tpu.memory_space<vmem>>, %arg4: memref<1x8x32xf32, #tpu.memory_space<vmem>>, %arg5: memref<1x32xf32, #tpu.memory_space<vmem>>, %arg6: memref<1x32xf32, #tpu.memory_space<vmem>>, %arg7: memref<32x32xbf16, #tpu.memory_space<vmem>>, %arg8: memref<32x64xbf16, #tpu.memory_space<vmem>>, %arg9: memref<32x32xbf16, #tpu.memory_space<vmem>>, %arg10: memref<1x32xf32, #tpu.memory_space<vmem>>, %arg11: memref<1x32xf32, #tpu.memory_space<vmem>>, %arg12: memref<1x32xf32, #tpu.memory_space<vmem>>, %arg13: memref<32x128xbf16, #tpu.memory_space<vmem>>, %arg14: memref<1x128xf32, #tpu.memory_space<vmem>>, %arg15: memref<128x32xbf16, #tpu.memory_space<vmem>>, %arg16: memref<1x32xf32, #tpu.memory_space<vmem>>, %arg17: memref<1x8x32xf32, #tpu.memory_space<vmem>>, %arg18: memref<1x8x32xf32, #tpu.memory_space<vmem>>) attributes {dimension_semantics = [#tpu.dimension_semantics<parallel>], iteration_bounds = array<i64: 2>, scalar_prefetch = 0 : i64, scratch_operands = 0 : i64, tpu.core_type = #tpu.core_type<tc>, window_params = [{transform_indices = @transform_0, window_bounds = array<i64: 1, 8, 32>}, {transform_indices = @transform_1, window_bounds = array<i64: 1, 8, 32>}, {transform_indices = @transform_2, window_bounds = array<i64: 1, 8, 32>}, {transform_indices = @transform_3, window_bounds = array<i64: 1, 8, 32>}, {pipeline_mode = #tpu.pipeline_mode<synchronous>, transform_indices = @transform_4, window_bounds = array<i64: 1, 32>}, {pipeline_mode = #tpu.pipeline_mode<synchronous>, transform_indices = @transform_5, window_bounds = array<i64: 1, 32>}, {pipeline_mode = #tpu.pipeline_mode<synchronous>, transform_indices = @transform_6, window_bounds = array<i64: 32, 32>}, {pipeline_mode = #tpu.pipeline_mode<synchronous>, transform_indices = @transform_7, window_bounds = array<i64: 32, 64>}, {pipeline_mode = #tpu.pipeline_mode<synchronous>, transform_indices = @transform_8, window_bounds = array<i64: 32, 32>}, {pipeline_mode = #tpu.pipeline_mode<synchronous>, transform_indices = @transform_9, window_bounds = array<i64: 1, 32>}, {pipeline_mode = #tpu.pipeline_mode<synchronous>, transform_indices = @transform_10, window_bounds = array<i64: 1, 32>}, {pipeline_mode = #tpu.pipeline_mode<synchronous>, transform_indices = @transform_11, window_bounds = array<i64: 1, 32>}, {pipeline_mode = #tpu.pipeline_mode<synchronous>, transform_indices = @transform_12, window_bounds = array<i64: 32, 128>}, {pipeline_mode = #tpu.pipeline_mode<synchronous>, transform_indices = @transform_13, window_bounds = array<i64: 1, 128>}, {pipeline_mode = #tpu.pipeline_mode<synchronous>, transform_indices = @transform_14, window_bounds = array<i64: 128, 32>}, {pipeline_mode = #tpu.pipeline_mode<synchronous>, transform_indices = @transform_15, window_bounds = array<i64: 1, 32>}, {transform_indices = @transform_16, window_bounds = array<i64: 1, 8, 32>}, {transform_indices = @transform_17, window_bounds = array<i64: 1, 8, 32>}]} {
    %c0 = arith.constant 0 : index
    %c0_0 = arith.constant 0 : index
    %c0_1 = arith.constant 0 : index
    %0 = vector.load %arg1[%c0, %c0_0, %c0_1] : memref<1x8x32xf32, #tpu.memory_space<vmem>>, vector<1x8x32xf32>
    %1 = vector.shape_cast %0 : vector<1x8x32xf32> to vector<8x32xf32>
    %c0_2 = arith.constant 0 : index
    %c0_3 = arith.constant 0 : index
    %c0_4 = arith.constant 0 : index
    %2 = vector.load %arg2[%c0_2, %c0_3, %c0_4] : memref<1x8x32xf32, #tpu.memory_space<vmem>>, vector<1x8x32xf32>
    %3 = vector.shape_cast %2 : vector<1x8x32xf32> to vector<8x32xf32>
    %4 = tpu.concatenate %1, %3 in 0 : vector<8x32xf32>, vector<8x32xf32> -> vector<16x32xf32>
    %c0_5 = arith.constant 0 : index
    %c0_6 = arith.constant 0 : index
    %c0_7 = arith.constant 0 : index
    %5 = vector.load %arg3[%c0_5, %c0_6, %c0_7] : memref<1x8x32xf32, #tpu.memory_space<vmem>>, vector<1x8x32xf32>
    %6 = vector.shape_cast %5 : vector<1x8x32xf32> to vector<8x32xf32>
    %c0_8 = arith.constant 0 : index
    %c0_9 = arith.constant 0 : index
    %c0_10 = arith.constant 0 : index
    %7 = vector.load %arg4[%c0_8, %c0_9, %c0_10] : memref<1x8x32xf32, #tpu.memory_space<vmem>>, vector<1x8x32xf32>
    %8 = vector.shape_cast %7 : vector<1x8x32xf32> to vector<8x32xf32>
    %9 = tpu.concatenate %6, %8 in 0 : vector<8x32xf32>, vector<8x32xf32> -> vector<16x32xf32>
    %c0_11 = arith.constant 0 : index
    %c0_12 = arith.constant 0 : index
    %10 = vector.load %arg5[%c0_11, %c0_12] : memref<1x32xf32, #tpu.memory_space<vmem>>, vector<1x32xf32>
    %c0_13 = arith.constant 0 : index
    %c0_14 = arith.constant 0 : index
    %11 = vector.load %arg6[%c0_13, %c0_14] : memref<1x32xf32, #tpu.memory_space<vmem>>, vector<1x32xf32>
    %cst = arith.constant dense<0.000000e+00> : vector<16xf32>
    %12 = vector.multi_reduction <add>, %4, %cst [1] : vector<16x32xf32> to vector<16xf32>
    %13 = vector.shape_cast %12 : vector<16xf32> to vector<16x1xf32>
    %cst_15 = arith.constant 3.200000e+01 : f32
    %14 = vector.broadcast %cst_15 : f32 to vector<16x1xf32>
    %15 = arith.divf %13, %14 : vector<16x1xf32>
    %16 = vector.broadcast %15 : vector<16x1xf32> to vector<16x32xf32>
    %17 = arith.subf %4, %16 : vector<16x32xf32>
    %18 = arith.mulf %17, %17 : vector<16x32xf32>
    %cst_16 = arith.constant dense<0.000000e+00> : vector<16xf32>
    %19 = vector.multi_reduction <add>, %18, %cst_16 [1] : vector<16x32xf32> to vector<16xf32>
    %20 = vector.shape_cast %19 : vector<16xf32> to vector<16x1xf32>
    %cst_17 = arith.constant 3.200000e+01 : f32
    %21 = vector.broadcast %cst_17 : f32 to vector<16x1xf32>
    %22 = arith.divf %20, %21 : vector<16x1xf32>
    %23 = vector.broadcast %15 : vector<16x1xf32> to vector<16x32xf32>
    %24 = arith.subf %4, %23 : vector<16x32xf32>
    %cst_18 = arith.constant 9.99999974E-6 : f32
    %25 = vector.broadcast %cst_18 : f32 to vector<16x1xf32>
    %26 = arith.addf %22, %25 : vector<16x1xf32>
    %27 = math.rsqrt %26 : vector<16x1xf32>
    %28 = vector.broadcast %27 : vector<16x1xf32> to vector<16x32xf32>
    %29 = arith.mulf %24, %28 : vector<16x32xf32>
    %30 = vector.broadcast %10 : vector<1x32xf32> to vector<16x32xf32>
    %31 = arith.mulf %29, %30 : vector<16x32xf32>
    %32 = vector.broadcast %11 : vector<1x32xf32> to vector<16x32xf32>
    %33 = arith.addf %31, %32 : vector<16x32xf32>
    %cst_19 = arith.constant dense<0.000000e+00> : vector<16xf32>
    %34 = vector.multi_reduction <add>, %9, %cst_19 [1] : vector<16x32xf32> to vector<16xf32>
    %35 = vector.shape_cast %34 : vector<16xf32> to vector<16x1xf32>
    %cst_20 = arith.constant 3.200000e+01 : f32
    %36 = vector.broadcast %cst_20 : f32 to vector<16x1xf32>
    %37 = arith.divf %35, %36 : vector<16x1xf32>
    %38 = vector.broadcast %37 : vector<16x1xf32> to vector<16x32xf32>
    %39 = arith.subf %9, %38 : vector<16x32xf32>
    %40 = arith.mulf %39, %39 : vector<16x32xf32>
    %cst_21 = arith.constant dense<0.000000e+00> : vector<16xf32>
    %41 = vector.multi_reduction <add>, %40, %cst_21 [1] : vector<16x32xf32> to vector<16xf32>
    %42 = vector.shape_cast %41 : vector<16xf32> to vector<16x1xf32>
    %cst_22 = arith.constant 3.200000e+01 : f32
    %43 = vector.broadcast %cst_22 : f32 to vector<16x1xf32>
    %44 = arith.divf %42, %43 : vector<16x1xf32>
    %45 = vector.broadcast %37 : vector<16x1xf32> to vector<16x32xf32>
    %46 = arith.subf %9, %45 : vector<16x32xf32>
    %cst_23 = arith.constant 9.99999974E-6 : f32
    %47 = vector.broadcast %cst_23 : f32 to vector<16x1xf32>
    %48 = arith.addf %44, %47 : vector<16x1xf32>
    %49 = math.rsqrt %48 : vector<16x1xf32>
    %50 = vector.broadcast %49 : vector<16x1xf32> to vector<16x32xf32>
    %51 = arith.mulf %46, %50 : vector<16x32xf32>
    %52 = vector.broadcast %10 : vector<1x32xf32> to vector<16x32xf32>
    %53 = arith.mulf %51, %52 : vector<16x32xf32>
    %54 = vector.broadcast %11 : vector<1x32xf32> to vector<16x32xf32>
    %55 = arith.addf %53, %54 : vector<16x32xf32>
    %56 = arith.truncf %33 : vector<16x32xf32> to vector<16x32xbf16>
    %c0_24 = arith.constant 0 : index
    %c0_25 = arith.constant 0 : index
    %57 = vector.load %arg7[%c0_24, %c0_25] : memref<32x32xbf16, #tpu.memory_space<vmem>>, vector<32x32xbf16>
    %cst_26 = arith.constant dense<0.000000e+00> : vector<16x32xf32>
    %58 = tpu.matmul %56, %57, %cst_26 {dimension_numbers = #tpu.dot_dimension_numbers<[1], [0], [0], [1], [0, 0, 1, 1], [], []>} : vector<16x32xbf16>, vector<32x32xbf16>, vector<16x32xf32> -> vector<16x32xf32>
    %59 = arith.truncf %55 : vector<16x32xf32> to vector<16x32xbf16>
    %c0_27 = arith.constant 0 : index
    %c0_28 = arith.constant 0 : index
    %60 = vector.load %arg8[%c0_27, %c0_28] : memref<32x64xbf16, #tpu.memory_space<vmem>>, vector<32x64xbf16>
    %cst_29 = arith.constant dense<0.000000e+00> : vector<16x64xf32>
    %61 = tpu.matmul %59, %60, %cst_29 {dimension_numbers = #tpu.dot_dimension_numbers<[1], [0], [0], [1], [0, 0, 1, 1], [], []>} : vector<16x32xbf16>, vector<32x64xbf16>, vector<16x64xf32> -> vector<16x64xf32>
    %c0_30 = arith.constant 0 : index
    %c0_31 = arith.constant 0 : index
    %62 = vector.load %arg10[%c0_30, %c0_31] : memref<1x32xf32, #tpu.memory_space<vmem>>, vector<1x32xf32>
    %63 = vector.extract_strided_slice %58 {offsets = [0, 0], sizes = [8, 32], strides = [1, 1]} : vector<16x32xf32> to vector<8x32xf32>
    %64 = vector.extract_strided_slice %61 {offsets = [0, 0], sizes = [16, 32], strides = [1, 1]} : vector<16x64xf32> to vector<16x32xf32>
    %65 = vector.extract_strided_slice %61 {offsets = [0, 32], sizes = [16, 32], strides = [1, 1]} : vector<16x64xf32> to vector<16x32xf32>
    %66 = arith.truncf %63 : vector<8x32xf32> to vector<8x32xbf16>
    %67 = arith.truncf %64 : vector<16x32xf32> to vector<16x32xbf16>
    %68 = arith.truncf %65 : vector<16x32xf32> to vector<16x32xbf16>
    %69 = vector.extract_strided_slice %66 {offsets = [0, 0], sizes = [8, 8], strides = [1, 1]} : vector<8x32xbf16> to vector<8x8xbf16>
    %70 = vector.extract_strided_slice %67 {offsets = [0, 0], sizes = [16, 8], strides = [1, 1]} : vector<16x32xbf16> to vector<16x8xbf16>
    %cst_32 = arith.constant dense<0.000000e+00> : vector<8x16xf32>
    %71 = tpu.matmul %69, %70, %cst_32 {dimension_numbers = #tpu.dot_dimension_numbers<[1], [1], [0], [0], [0, 0, 1, 0], [], []>} : vector<8x8xbf16>, vector<16x8xbf16>, vector<8x16xf32> -> vector<8x16xf32>
    %cst_33 = arith.constant dense<0xFF800000> : vector<8xf32>
    %72 = vector.multi_reduction <maximumf>, %71, %cst_33 [1] : vector<8x16xf32> to vector<8xf32>
    %73 = vector.shape_cast %72 : vector<8xf32> to vector<8x1xf32>
    %74 = vector.broadcast %73 : vector<8x1xf32> to vector<8x16xf32>
    %75 = arith.subf %71, %74 : vector<8x16xf32>
    %76 = math.exp %75 : vector<8x16xf32>
    %cst_34 = arith.constant dense<0.000000e+00> : vector<8xf32>
    %77 = vector.multi_reduction <add>, %76, %cst_34 [1] : vector<8x16xf32> to vector<8xf32>
    %78 = vector.shape_cast %77 : vector<8xf32> to vector<8x1xf32>
    %79 = arith.truncf %76 : vector<8x16xf32> to vector<8x16xbf16>
    %80 = vector.extract_strided_slice %68 {offsets = [0, 0], sizes = [16, 8], strides = [1, 1]} : vector<16x32xbf16> to vector<16x8xbf16>
    %cst_35 = arith.constant dense<0.000000e+00> : vector<8x8xf32>
    %81 = tpu.matmul %79, %80, %cst_35 {dimension_numbers = #tpu.dot_dimension_numbers<[1], [0], [0], [1], [0, 0, 1, 1], [], []>} : vector<8x16xbf16>, vector<16x8xbf16>, vector<8x8xf32> -> vector<8x8xf32>
    %82 = tpu.reciprocal %78 {approx = true} : vector<8x1xf32> -> vector<8x1xf32>
    %83 = vector.broadcast %82 : vector<8x1xf32> to vector<8x8xf32>
    %84 = arith.mulf %81, %83 : vector<8x8xf32>
    %85 = vector.extract_strided_slice %66 {offsets = [0, 8], sizes = [8, 8], strides = [1, 1]} : vector<8x32xbf16> to vector<8x8xbf16>
    %86 = vector.extract_strided_slice %67 {offsets = [0, 8], sizes = [16, 8], strides = [1, 1]} : vector<16x32xbf16> to vector<16x8xbf16>
    %cst_36 = arith.constant dense<0.000000e+00> : vector<8x16xf32>
    %87 = tpu.matmul %85, %86, %cst_36 {dimension_numbers = #tpu.dot_dimension_numbers<[1], [1], [0], [0], [0, 0, 1, 0], [], []>} : vector<8x8xbf16>, vector<16x8xbf16>, vector<8x16xf32> -> vector<8x16xf32>
    %cst_37 = arith.constant dense<0xFF800000> : vector<8xf32>
    %88 = vector.multi_reduction <maximumf>, %87, %cst_37 [1] : vector<8x16xf32> to vector<8xf32>
    %89 = vector.shape_cast %88 : vector<8xf32> to vector<8x1xf32>
    %90 = vector.broadcast %89 : vector<8x1xf32> to vector<8x16xf32>
    %91 = arith.subf %87, %90 : vector<8x16xf32>
    %92 = math.exp %91 : vector<8x16xf32>
    %cst_38 = arith.constant dense<0.000000e+00> : vector<8xf32>
    %93 = vector.multi_reduction <add>, %92, %cst_38 [1] : vector<8x16xf32> to vector<8xf32>
    %94 = vector.shape_cast %93 : vector<8xf32> to vector<8x1xf32>
    %95 = arith.truncf %92 : vector<8x16xf32> to vector<8x16xbf16>
    %96 = vector.extract_strided_slice %68 {offsets = [0, 8], sizes = [16, 8], strides = [1, 1]} : vector<16x32xbf16> to vector<16x8xbf16>
    %cst_39 = arith.constant dense<0.000000e+00> : vector<8x8xf32>
    %97 = tpu.matmul %95, %96, %cst_39 {dimension_numbers = #tpu.dot_dimension_numbers<[1], [0], [0], [1], [0, 0, 1, 1], [], []>} : vector<8x16xbf16>, vector<16x8xbf16>, vector<8x8xf32> -> vector<8x8xf32>
    %98 = tpu.reciprocal %94 {approx = true} : vector<8x1xf32> -> vector<8x1xf32>
    %99 = vector.broadcast %98 : vector<8x1xf32> to vector<8x8xf32>
    %100 = arith.mulf %97, %99 : vector<8x8xf32>
    %101 = vector.extract_strided_slice %66 {offsets = [0, 16], sizes = [8, 8], strides = [1, 1]} : vector<8x32xbf16> to vector<8x8xbf16>
    %102 = vector.extract_strided_slice %67 {offsets = [0, 16], sizes = [16, 8], strides = [1, 1]} : vector<16x32xbf16> to vector<16x8xbf16>
    %cst_40 = arith.constant dense<0.000000e+00> : vector<8x16xf32>
    %103 = tpu.matmul %101, %102, %cst_40 {dimension_numbers = #tpu.dot_dimension_numbers<[1], [1], [0], [0], [0, 0, 1, 0], [], []>} : vector<8x8xbf16>, vector<16x8xbf16>, vector<8x16xf32> -> vector<8x16xf32>
    %cst_41 = arith.constant dense<0xFF800000> : vector<8xf32>
    %104 = vector.multi_reduction <maximumf>, %103, %cst_41 [1] : vector<8x16xf32> to vector<8xf32>
    %105 = vector.shape_cast %104 : vector<8xf32> to vector<8x1xf32>
    %106 = vector.broadcast %105 : vector<8x1xf32> to vector<8x16xf32>
    %107 = arith.subf %103, %106 : vector<8x16xf32>
    %108 = math.exp %107 : vector<8x16xf32>
    %cst_42 = arith.constant dense<0.000000e+00> : vector<8xf32>
    %109 = vector.multi_reduction <add>, %108, %cst_42 [1] : vector<8x16xf32> to vector<8xf32>
    %110 = vector.shape_cast %109 : vector<8xf32> to vector<8x1xf32>
    %111 = arith.truncf %108 : vector<8x16xf32> to vector<8x16xbf16>
    %112 = vector.extract_strided_slice %68 {offsets = [0, 16], sizes = [16, 8], strides = [1, 1]} : vector<16x32xbf16> to vector<16x8xbf16>
    %cst_43 = arith.constant dense<0.000000e+00> : vector<8x8xf32>
    %113 = tpu.matmul %111, %112, %cst_43 {dimension_numbers = #tpu.dot_dimension_numbers<[1], [0], [0], [1], [0, 0, 1, 1], [], []>} : vector<8x16xbf16>, vector<16x8xbf16>, vector<8x8xf32> -> vector<8x8xf32>
    %114 = tpu.reciprocal %110 {approx = true} : vector<8x1xf32> -> vector<8x1xf32>
    %115 = vector.broadcast %114 : vector<8x1xf32> to vector<8x8xf32>
    %116 = arith.mulf %113, %115 : vector<8x8xf32>
    %117 = vector.extract_strided_slice %66 {offsets = [0, 24], sizes = [8, 8], strides = [1, 1]} : vector<8x32xbf16> to vector<8x8xbf16>
    %118 = vector.extract_strided_slice %67 {offsets = [0, 24], sizes = [16, 8], strides = [1, 1]} : vector<16x32xbf16> to vector<16x8xbf16>
    %cst_44 = arith.constant dense<0.000000e+00> : vector<8x16xf32>
    %119 = tpu.matmul %117, %118, %cst_44 {dimension_numbers = #tpu.dot_dimension_numbers<[1], [1], [0], [0], [0, 0, 1, 0], [], []>} : vector<8x8xbf16>, vector<16x8xbf16>, vector<8x16xf32> -> vector<8x16xf32>
    %cst_45 = arith.constant dense<0xFF800000> : vector<8xf32>
    %120 = vector.multi_reduction <maximumf>, %119, %cst_45 [1] : vector<8x16xf32> to vector<8xf32>
    %121 = vector.shape_cast %120 : vector<8xf32> to vector<8x1xf32>
    %122 = vector.broadcast %121 : vector<8x1xf32> to vector<8x16xf32>
    %123 = arith.subf %119, %122 : vector<8x16xf32>
    %124 = math.exp %123 : vector<8x16xf32>
    %cst_46 = arith.constant dense<0.000000e+00> : vector<8xf32>
    %125 = vector.multi_reduction <add>, %124, %cst_46 [1] : vector<8x16xf32> to vector<8xf32>
    %126 = vector.shape_cast %125 : vector<8xf32> to vector<8x1xf32>
    %127 = arith.truncf %124 : vector<8x16xf32> to vector<8x16xbf16>
    %128 = vector.extract_strided_slice %68 {offsets = [0, 24], sizes = [16, 8], strides = [1, 1]} : vector<16x32xbf16> to vector<16x8xbf16>
    %cst_47 = arith.constant dense<0.000000e+00> : vector<8x8xf32>
    %129 = tpu.matmul %127, %128, %cst_47 {dimension_numbers = #tpu.dot_dimension_numbers<[1], [0], [0], [1], [0, 0, 1, 1], [], []>} : vector<8x16xbf16>, vector<16x8xbf16>, vector<8x8xf32> -> vector<8x8xf32>
    %130 = tpu.reciprocal %126 {approx = true} : vector<8x1xf32> -> vector<8x1xf32>
    %131 = vector.broadcast %130 : vector<8x1xf32> to vector<8x8xf32>
    %132 = arith.mulf %129, %131 : vector<8x8xf32>
    %133 = tpu.concatenate %84, %100, %116, %132 in 1 : vector<8x8xf32>, vector<8x8xf32>, vector<8x8xf32>, vector<8x8xf32> -> vector<8x32xf32>
    %134 = arith.truncf %133 : vector<8x32xf32> to vector<8x32xbf16>
    %c0_48 = arith.constant 0 : index
    %c0_49 = arith.constant 0 : index
    %135 = vector.load %arg9[%c0_48, %c0_49] : memref<32x32xbf16, #tpu.memory_space<vmem>>, vector<32x32xbf16>
    %cst_50 = arith.constant dense<0.000000e+00> : vector<8x32xf32>
    %136 = tpu.matmul %134, %135, %cst_50 {dimension_numbers = #tpu.dot_dimension_numbers<[1], [0], [0], [1], [0, 0, 1, 1], [], []>} : vector<8x32xbf16>, vector<32x32xbf16>, vector<8x32xf32> -> vector<8x32xf32>
    %137 = vector.broadcast %62 : vector<1x32xf32> to vector<8x32xf32>
    %138 = arith.addf %136, %137 : vector<8x32xf32>
    %139 = arith.truncf %138 : vector<8x32xf32> to vector<8x32xbf16>
    %c0_51 = arith.constant 0 : index
    %c0_52 = arith.constant 0 : index
    %140 = vector.load %arg8[%c0_51, %c0_52] : memref<32x64xbf16, #tpu.memory_space<vmem>>, vector<32x64xbf16>
    %cst_53 = arith.constant dense<0.000000e+00> : vector<8x64xf32>
    %141 = tpu.matmul %139, %140, %cst_53 {dimension_numbers = #tpu.dot_dimension_numbers<[1], [0], [0], [1], [0, 0, 1, 1], [], []>} : vector<8x32xbf16>, vector<32x64xbf16>, vector<8x64xf32> -> vector<8x64xf32>
    %142 = vector.extract_strided_slice %58 {offsets = [8, 0], sizes = [8, 32], strides = [1, 1]} : vector<16x32xf32> to vector<8x32xf32>
    %143 = vector.extract_strided_slice %141 {offsets = [0, 0], sizes = [8, 32], strides = [1, 1]} : vector<8x64xf32> to vector<8x32xf32>
    %144 = vector.extract_strided_slice %141 {offsets = [0, 32], sizes = [8, 32], strides = [1, 1]} : vector<8x64xf32> to vector<8x32xf32>
    %145 = arith.truncf %142 : vector<8x32xf32> to vector<8x32xbf16>
    %146 = arith.truncf %143 : vector<8x32xf32> to vector<8x32xbf16>
    %147 = arith.truncf %144 : vector<8x32xf32> to vector<8x32xbf16>
    %148 = vector.extract_strided_slice %145 {offsets = [0, 0], sizes = [8, 8], strides = [1, 1]} : vector<8x32xbf16> to vector<8x8xbf16>
    %149 = vector.extract_strided_slice %146 {offsets = [0, 0], sizes = [8, 8], strides = [1, 1]} : vector<8x32xbf16> to vector<8x8xbf16>
    %cst_54 = arith.constant dense<0.000000e+00> : vector<8x8xf32>
    %150 = tpu.matmul %148, %149, %cst_54 {dimension_numbers = #tpu.dot_dimension_numbers<[1], [1], [0], [0], [0, 0, 1, 0], [], []>} : vector<8x8xbf16>, vector<8x8xbf16>, vector<8x8xf32> -> vector<8x8xf32>
    %cst_55 = arith.constant dense<0xFF800000> : vector<8xf32>
    %151 = vector.multi_reduction <maximumf>, %150, %cst_55 [1] : vector<8x8xf32> to vector<8xf32>
    %152 = vector.shape_cast %151 : vector<8xf32> to vector<8x1xf32>
    %153 = vector.broadcast %152 : vector<8x1xf32> to vector<8x8xf32>
    %154 = arith.subf %150, %153 : vector<8x8xf32>
    %155 = math.exp %154 : vector<8x8xf32>
    %cst_56 = arith.constant dense<0.000000e+00> : vector<8xf32>
    %156 = vector.multi_reduction <add>, %155, %cst_56 [1] : vector<8x8xf32> to vector<8xf32>
    %157 = vector.shape_cast %156 : vector<8xf32> to vector<8x1xf32>
    %158 = arith.truncf %155 : vector<8x8xf32> to vector<8x8xbf16>
    %159 = vector.extract_strided_slice %147 {offsets = [0, 0], sizes = [8, 8], strides = [1, 1]} : vector<8x32xbf16> to vector<8x8xbf16>
    %cst_57 = arith.constant dense<0.000000e+00> : vector<8x8xf32>
    %160 = tpu.matmul %158, %159, %cst_57 {dimension_numbers = #tpu.dot_dimension_numbers<[1], [0], [0], [1], [0, 0, 1, 1], [], []>} : vector<8x8xbf16>, vector<8x8xbf16>, vector<8x8xf32> -> vector<8x8xf32>
    %161 = tpu.reciprocal %157 {approx = true} : vector<8x1xf32> -> vector<8x1xf32>
    %162 = vector.broadcast %161 : vector<8x1xf32> to vector<8x8xf32>
    %163 = arith.mulf %160, %162 : vector<8x8xf32>
    %164 = vector.extract_strided_slice %145 {offsets = [0, 8], sizes = [8, 8], strides = [1, 1]} : vector<8x32xbf16> to vector<8x8xbf16>
    %165 = vector.extract_strided_slice %146 {offsets = [0, 8], sizes = [8, 8], strides = [1, 1]} : vector<8x32xbf16> to vector<8x8xbf16>
    %cst_58 = arith.constant dense<0.000000e+00> : vector<8x8xf32>
    %166 = tpu.matmul %164, %165, %cst_58 {dimension_numbers = #tpu.dot_dimension_numbers<[1], [1], [0], [0], [0, 0, 1, 0], [], []>} : vector<8x8xbf16>, vector<8x8xbf16>, vector<8x8xf32> -> vector<8x8xf32>
    %cst_59 = arith.constant dense<0xFF800000> : vector<8xf32>
    %167 = vector.multi_reduction <maximumf>, %166, %cst_59 [1] : vector<8x8xf32> to vector<8xf32>
    %168 = vector.shape_cast %167 : vector<8xf32> to vector<8x1xf32>
    %169 = vector.broadcast %168 : vector<8x1xf32> to vector<8x8xf32>
    %170 = arith.subf %166, %169 : vector<8x8xf32>
    %171 = math.exp %170 : vector<8x8xf32>
    %cst_60 = arith.constant dense<0.000000e+00> : vector<8xf32>
    %172 = vector.multi_reduction <add>, %171, %cst_60 [1] : vector<8x8xf32> to vector<8xf32>
    %173 = vector.shape_cast %172 : vector<8xf32> to vector<8x1xf32>
    %174 = arith.truncf %171 : vector<8x8xf32> to vector<8x8xbf16>
    %175 = vector.extract_strided_slice %147 {offsets = [0, 8], sizes = [8, 8], strides = [1, 1]} : vector<8x32xbf16> to vector<8x8xbf16>
    %cst_61 = arith.constant dense<0.000000e+00> : vector<8x8xf32>
    %176 = tpu.matmul %174, %175, %cst_61 {dimension_numbers = #tpu.dot_dimension_numbers<[1], [0], [0], [1], [0, 0, 1, 1], [], []>} : vector<8x8xbf16>, vector<8x8xbf16>, vector<8x8xf32> -> vector<8x8xf32>
    %177 = tpu.reciprocal %173 {approx = true} : vector<8x1xf32> -> vector<8x1xf32>
    %178 = vector.broadcast %177 : vector<8x1xf32> to vector<8x8xf32>
    %179 = arith.mulf %176, %178 : vector<8x8xf32>
    %180 = vector.extract_strided_slice %145 {offsets = [0, 16], sizes = [8, 8], strides = [1, 1]} : vector<8x32xbf16> to vector<8x8xbf16>
    %181 = vector.extract_strided_slice %146 {offsets = [0, 16], sizes = [8, 8], strides = [1, 1]} : vector<8x32xbf16> to vector<8x8xbf16>
    %cst_62 = arith.constant dense<0.000000e+00> : vector<8x8xf32>
    %182 = tpu.matmul %180, %181, %cst_62 {dimension_numbers = #tpu.dot_dimension_numbers<[1], [1], [0], [0], [0, 0, 1, 0], [], []>} : vector<8x8xbf16>, vector<8x8xbf16>, vector<8x8xf32> -> vector<8x8xf32>
    %cst_63 = arith.constant dense<0xFF800000> : vector<8xf32>
    %183 = vector.multi_reduction <maximumf>, %182, %cst_63 [1] : vector<8x8xf32> to vector<8xf32>
    %184 = vector.shape_cast %183 : vector<8xf32> to vector<8x1xf32>
    %185 = vector.broadcast %184 : vector<8x1xf32> to vector<8x8xf32>
    %186 = arith.subf %182, %185 : vector<8x8xf32>
    %187 = math.exp %186 : vector<8x8xf32>
    %cst_64 = arith.constant dense<0.000000e+00> : vector<8xf32>
    %188 = vector.multi_reduction <add>, %187, %cst_64 [1] : vector<8x8xf32> to vector<8xf32>
    %189 = vector.shape_cast %188 : vector<8xf32> to vector<8x1xf32>
    %190 = arith.truncf %187 : vector<8x8xf32> to vector<8x8xbf16>
    %191 = vector.extract_strided_slice %147 {offsets = [0, 16], sizes = [8, 8], strides = [1, 1]} : vector<8x32xbf16> to vector<8x8xbf16>
    %cst_65 = arith.constant dense<0.000000e+00> : vector<8x8xf32>
    %192 = tpu.matmul %190, %191, %cst_65 {dimension_numbers = #tpu.dot_dimension_numbers<[1], [0], [0], [1], [0, 0, 1, 1], [], []>} : vector<8x8xbf16>, vector<8x8xbf16>, vector<8x8xf32> -> vector<8x8xf32>
    %193 = tpu.reciprocal %189 {approx = true} : vector<8x1xf32> -> vector<8x1xf32>
    %194 = vector.broadcast %193 : vector<8x1xf32> to vector<8x8xf32>
    %195 = arith.mulf %192, %194 : vector<8x8xf32>
    %196 = vector.extract_strided_slice %145 {offsets = [0, 24], sizes = [8, 8], strides = [1, 1]} : vector<8x32xbf16> to vector<8x8xbf16>
    %197 = vector.extract_strided_slice %146 {offsets = [0, 24], sizes = [8, 8], strides = [1, 1]} : vector<8x32xbf16> to vector<8x8xbf16>
    %cst_66 = arith.constant dense<0.000000e+00> : vector<8x8xf32>
    %198 = tpu.matmul %196, %197, %cst_66 {dimension_numbers = #tpu.dot_dimension_numbers<[1], [1], [0], [0], [0, 0, 1, 0], [], []>} : vector<8x8xbf16>, vector<8x8xbf16>, vector<8x8xf32> -> vector<8x8xf32>
    %cst_67 = arith.constant dense<0xFF800000> : vector<8xf32>
    %199 = vector.multi_reduction <maximumf>, %198, %cst_67 [1] : vector<8x8xf32> to vector<8xf32>
    %200 = vector.shape_cast %199 : vector<8xf32> to vector<8x1xf32>
    %201 = vector.broadcast %200 : vector<8x1xf32> to vector<8x8xf32>
    %202 = arith.subf %198, %201 : vector<8x8xf32>
    %203 = math.exp %202 : vector<8x8xf32>
    %cst_68 = arith.constant dense<0.000000e+00> : vector<8xf32>
    %204 = vector.multi_reduction <add>, %203, %cst_68 [1] : vector<8x8xf32> to vector<8xf32>
    %205 = vector.shape_cast %204 : vector<8xf32> to vector<8x1xf32>
    %206 = arith.truncf %203 : vector<8x8xf32> to vector<8x8xbf16>
    %207 = vector.extract_strided_slice %147 {offsets = [0, 24], sizes = [8, 8], strides = [1, 1]} : vector<8x32xbf16> to vector<8x8xbf16>
    %cst_69 = arith.constant dense<0.000000e+00> : vector<8x8xf32>
    %208 = tpu.matmul %206, %207, %cst_69 {dimension_numbers = #tpu.dot_dimension_numbers<[1], [0], [0], [1], [0, 0, 1, 1], [], []>} : vector<8x8xbf16>, vector<8x8xbf16>, vector<8x8xf32> -> vector<8x8xf32>
    %209 = tpu.reciprocal %205 {approx = true} : vector<8x1xf32> -> vector<8x1xf32>
    %210 = vector.broadcast %209 : vector<8x1xf32> to vector<8x8xf32>
    %211 = arith.mulf %208, %210 : vector<8x8xf32>
    %212 = tpu.concatenate %163, %179, %195, %211 in 1 : vector<8x8xf32>, vector<8x8xf32>, vector<8x8xf32>, vector<8x8xf32> -> vector<8x32xf32>
    %213 = arith.truncf %212 : vector<8x32xf32> to vector<8x32xbf16>
    %c0_70 = arith.constant 0 : index
    %c0_71 = arith.constant 0 : index
    %214 = vector.load %arg9[%c0_70, %c0_71] : memref<32x32xbf16, #tpu.memory_space<vmem>>, vector<32x32xbf16>
    %cst_72 = arith.constant dense<0.000000e+00> : vector<8x32xf32>
    %215 = tpu.matmul %213, %214, %cst_72 {dimension_numbers = #tpu.dot_dimension_numbers<[1], [0], [0], [1], [0, 0, 1, 1], [], []>} : vector<8x32xbf16>, vector<32x32xbf16>, vector<8x32xf32> -> vector<8x32xf32>
    %216 = vector.broadcast %62 : vector<1x32xf32> to vector<8x32xf32>
    %217 = arith.addf %215, %216 : vector<8x32xf32>
    %218 = tpu.concatenate %138, %217 in 0 : vector<8x32xf32>, vector<8x32xf32> -> vector<16x32xf32>
    %cst_73 = arith.constant 5.000000e-01 : f32
    %219 = vector.broadcast %cst_73 : f32 to vector<16x32xf32>
    %220 = arith.mulf %219, %218 : vector<16x32xf32>
    %221 = arith.addf %4, %220 : vector<16x32xf32>
    %c0_74 = arith.constant 0 : index
    %c0_75 = arith.constant 0 : index
    %222 = vector.load %arg11[%c0_74, %c0_75] : memref<1x32xf32, #tpu.memory_space<vmem>>, vector<1x32xf32>
    %c0_76 = arith.constant 0 : index
    %c0_77 = arith.constant 0 : index
    %223 = vector.load %arg12[%c0_76, %c0_77] : memref<1x32xf32, #tpu.memory_space<vmem>>, vector<1x32xf32>
    %cst_78 = arith.constant dense<0.000000e+00> : vector<16xf32>
    %224 = vector.multi_reduction <add>, %221, %cst_78 [1] : vector<16x32xf32> to vector<16xf32>
    %225 = vector.shape_cast %224 : vector<16xf32> to vector<16x1xf32>
    %cst_79 = arith.constant 3.200000e+01 : f32
    %226 = vector.broadcast %cst_79 : f32 to vector<16x1xf32>
    %227 = arith.divf %225, %226 : vector<16x1xf32>
    %228 = vector.broadcast %227 : vector<16x1xf32> to vector<16x32xf32>
    %229 = arith.subf %221, %228 : vector<16x32xf32>
    %230 = arith.mulf %229, %229 : vector<16x32xf32>
    %cst_80 = arith.constant dense<0.000000e+00> : vector<16xf32>
    %231 = vector.multi_reduction <add>, %230, %cst_80 [1] : vector<16x32xf32> to vector<16xf32>
    %232 = vector.shape_cast %231 : vector<16xf32> to vector<16x1xf32>
    %cst_81 = arith.constant 3.200000e+01 : f32
    %233 = vector.broadcast %cst_81 : f32 to vector<16x1xf32>
    %234 = arith.divf %232, %233 : vector<16x1xf32>
    %235 = vector.broadcast %227 : vector<16x1xf32> to vector<16x32xf32>
    %236 = arith.subf %221, %235 : vector<16x32xf32>
    %cst_82 = arith.constant 9.99999974E-6 : f32
    %237 = vector.broadcast %cst_82 : f32 to vector<16x1xf32>
    %238 = arith.addf %234, %237 : vector<16x1xf32>
    %239 = math.rsqrt %238 : vector<16x1xf32>
    %240 = vector.broadcast %239 : vector<16x1xf32> to vector<16x32xf32>
    %241 = arith.mulf %236, %240 : vector<16x32xf32>
    %242 = vector.broadcast %222 : vector<1x32xf32> to vector<16x32xf32>
    %243 = arith.mulf %241, %242 : vector<16x32xf32>
    %244 = vector.broadcast %223 : vector<1x32xf32> to vector<16x32xf32>
    %245 = arith.addf %243, %244 : vector<16x32xf32>
    %246 = arith.truncf %245 : vector<16x32xf32> to vector<16x32xbf16>
    %c0_83 = arith.constant 0 : index
    %c0_84 = arith.constant 0 : index
    %247 = vector.load %arg13[%c0_83, %c0_84] : memref<32x128xbf16, #tpu.memory_space<vmem>>, vector<32x128xbf16>
    %cst_85 = arith.constant dense<0.000000e+00> : vector<16x128xf32>
    %248 = tpu.matmul %246, %247, %cst_85 {dimension_numbers = #tpu.dot_dimension_numbers<[1], [0], [0], [1], [0, 0, 1, 1], [], []>} : vector<16x32xbf16>, vector<32x128xbf16>, vector<16x128xf32> -> vector<16x128xf32>
    %c0_86 = arith.constant 0 : index
    %c0_87 = arith.constant 0 : index
    %249 = vector.load %arg14[%c0_86, %c0_87] : memref<1x128xf32, #tpu.memory_space<vmem>>, vector<1x128xf32>
    %250 = vector.broadcast %249 : vector<1x128xf32> to vector<16x128xf32>
    %251 = arith.addf %248, %250 : vector<16x128xf32>
    %cst_88 = arith.constant 5.000000e-01 : f32
    %252 = vector.broadcast %cst_88 : f32 to vector<16x128xf32>
    %253 = arith.mulf %252, %251 : vector<16x128xf32>
    %cst_89 = arith.constant 4.471500e-02 : f32
    %254 = vector.broadcast %cst_89 : f32 to vector<16x128xf32>
    %255 = arith.mulf %254, %251 : vector<16x128xf32>
    %256 = arith.mulf %255, %251 : vector<16x128xf32>
    %257 = arith.mulf %256, %251 : vector<16x128xf32>
    %258 = arith.addf %251, %257 : vector<16x128xf32>
    %cst_90 = arith.constant 0.797884583 : f32
    %259 = vector.broadcast %cst_90 : f32 to vector<16x128xf32>
    %260 = arith.mulf %259, %258 : vector<16x128xf32>
    %261 = math.tanh %260 : vector<16x128xf32>
    %cst_91 = arith.constant 1.000000e+00 : f32
    %262 = vector.broadcast %cst_91 : f32 to vector<16x128xf32>
    %263 = arith.addf %262, %261 : vector<16x128xf32>
    %264 = arith.mulf %253, %263 : vector<16x128xf32>
    %265 = arith.truncf %264 : vector<16x128xf32> to vector<16x128xbf16>
    %c0_92 = arith.constant 0 : index
    %c0_93 = arith.constant 0 : index
    %266 = vector.load %arg15[%c0_92, %c0_93] : memref<128x32xbf16, #tpu.memory_space<vmem>>, vector<128x32xbf16>
    %cst_94 = arith.constant dense<0.000000e+00> : vector<16x32xf32>
    %267 = tpu.matmul %265, %266, %cst_94 {dimension_numbers = #tpu.dot_dimension_numbers<[1], [0], [0], [1], [0, 0, 1, 1], [], []>} : vector<16x128xbf16>, vector<128x32xbf16>, vector<16x32xf32> -> vector<16x32xf32>
    %268 = arith.addf %221, %267 : vector<16x32xf32>
    %c0_95 = arith.constant 0 : index
    %c0_96 = arith.constant 0 : index
    %269 = vector.load %arg16[%c0_95, %c0_96] : memref<1x32xf32, #tpu.memory_space<vmem>>, vector<1x32xf32>
    %270 = vector.broadcast %269 : vector<1x32xf32> to vector<16x32xf32>
    %271 = arith.addf %268, %270 : vector<16x32xf32>
    %272 = vector.extract_strided_slice %271 {offsets = [0, 0], sizes = [8, 32], strides = [1, 1]} : vector<16x32xf32> to vector<8x32xf32>
    %c0_97 = arith.constant 0 : index
    %c0_98 = arith.constant 0 : index
    %c0_99 = arith.constant 0 : index
    %273 = vector.load %arg17[%c0_97, %c0_98, %c0_99] : memref<1x8x32xf32, #tpu.memory_space<vmem>>, vector<1x8x32xf32>
    %274 = vector.shape_cast %273 : vector<1x8x32xf32> to vector<8x32xf32>
    %275 = vector.shape_cast %272 : vector<8x32xf32> to vector<1x8x32xf32>
    tpu.vector_store %arg17[%c0_97, %c0_98, %c0_99], %275 {strides = array<i32>} : memref<1x8x32xf32, #tpu.memory_space<vmem>>, vector<1x8x32xf32>,
    %276 = vector.extract_strided_slice %271 {offsets = [8, 0], sizes = [8, 32], strides = [1, 1]} : vector<16x32xf32> to vector<8x32xf32>
    %c0_100 = arith.constant 0 : index
    %c0_101 = arith.constant 0 : index
    %c0_102 = arith.constant 0 : index
    %277 = vector.load %arg18[%c0_100, %c0_101, %c0_102] : memref<1x8x32xf32, #tpu.memory_space<vmem>>, vector<1x8x32xf32>
    %278 = vector.shape_cast %277 : vector<1x8x32xf32> to vector<8x32xf32>
    %279 = vector.shape_cast %276 : vector<8x32xf32> to vector<1x8x32xf32>
    tpu.vector_store %arg18[%c0_100, %c0_101, %c0_102], %279 {strides = array<i32>} : memref<1x8x32xf32, #tpu.memory_space<vmem>>, vector<1x8x32xf32>,
    return
  }
  func.func @transform_0(%arg0: i32) -> (i32, i32, i32) {
    %c0_i32 = arith.constant 0 : i32
    %c0_i32_0 = arith.constant 0 : i32
    %c0_i32_1 = arith.constant 0 : i32
    return %arg0, %c0_i32, %c0_i32_0 : i32, i32, i32
  }
  func.func @transform_1(%arg0: i32) -> (i32, i32, i32) {
    %c0_i32 = arith.constant 0 : i32
    %c0_i32_0 = arith.constant 0 : i32
    %c0_i32_1 = arith.constant 0 : i32
    return %arg0, %c0_i32, %c0_i32_0 : i32, i32, i32
  }
  func.func @transform_2(%arg0: i32) -> (i32, i32, i32) {
    %c0_i32 = arith.constant 0 : i32
    %c0_i32_0 = arith.constant 0 : i32
    %c0_i32_1 = arith.constant 0 : i32
    return %arg0, %c0_i32, %c0_i32_0 : i32, i32, i32
  }
  func.func @transform_3(%arg0: i32) -> (i32, i32, i32) {
    %c0_i32 = arith.constant 0 : i32
    %c0_i32_0 = arith.constant 0 : i32
    %c0_i32_1 = arith.constant 0 : i32
    return %arg0, %c0_i32, %c0_i32_0 : i32, i32, i32
  }
  func.func @transform_4(%arg0: i32) -> (i32, i32) {
    %c0_i32 = arith.constant 0 : i32
    %c0_i32_0 = arith.constant 0 : i32
    %c0_i32_1 = arith.constant 0 : i32
    return %c0_i32, %c0_i32_0 : i32, i32
  }
  func.func @transform_5(%arg0: i32) -> (i32, i32) {
    %c0_i32 = arith.constant 0 : i32
    %c0_i32_0 = arith.constant 0 : i32
    %c0_i32_1 = arith.constant 0 : i32
    return %c0_i32, %c0_i32_0 : i32, i32
  }
  func.func @transform_6(%arg0: i32) -> (i32, i32) {
    %c0_i32 = arith.constant 0 : i32
    %c0_i32_0 = arith.constant 0 : i32
    %c0_i32_1 = arith.constant 0 : i32
    return %c0_i32, %c0_i32_0 : i32, i32
  }
  func.func @transform_7(%arg0: i32) -> (i32, i32) {
    %c0_i32 = arith.constant 0 : i32
    %c0_i32_0 = arith.constant 0 : i32
    %c0_i32_1 = arith.constant 0 : i32
    return %c0_i32, %c0_i32_0 : i32, i32
  }
  func.func @transform_8(%arg0: i32) -> (i32, i32) {
    %c0_i32 = arith.constant 0 : i32
    %c0_i32_0 = arith.constant 0 : i32
    %c0_i32_1 = arith.constant 0 : i32
    return %c0_i32, %c0_i32_0 : i32, i32
  }
  func.func @transform_9(%arg0: i32) -> (i32, i32) {
    %c0_i32 = arith.constant 0 : i32
    %c0_i32_0 = arith.constant 0 : i32
    %c0_i32_1 = arith.constant 0 : i32
    return %c0_i32, %c0_i32_0 : i32, i32
  }
  func.func @transform_10(%arg0: i32) -> (i32, i32) {
    %c0_i32 = arith.constant 0 : i32
    %c0_i32_0 = arith.constant 0 : i32
    %c0_i32_1 = arith.constant 0 : i32
    return %c0_i32, %c0_i32_0 : i32, i32
  }
  func.func @transform_11(%arg0: i32) -> (i32, i32) {
    %c0_i32 = arith.constant 0 : i32
    %c0_i32_0 = arith.constant 0 : i32
    %c0_i32_1 = arith.constant 0 : i32
    return %c0_i32, %c0_i32_0 : i32, i32
  }
  func.func @transform_12(%arg0: i32) -> (i32, i32) {
    %c0_i32 = arith.constant 0 : i32
    %c0_i32_0 = arith.constant 0 : i32
    %c0_i32_1 = arith.constant 0 : i32
    return %c0_i32, %c0_i32_0 : i32, i32
  }
  func.func @transform_13(%arg0: i32) -> (i32, i32) {
    %c0_i32 = arith.constant 0 : i32
    %c0_i32_0 = arith.constant 0 : i32
    %c0_i32_1 = arith.constant 0 : i32
    return %c0_i32, %c0_i32_0 : i32, i32
  }
  func.func @transform_14(%arg0: i32) -> (i32, i32) {
    %c0_i32 = arith.constant 0 : i32
    %c0_i32_0 = arith.constant 0 : i32
    %c0_i32_1 = arith.constant 0 : i32
    return %c0_i32, %c0_i32_0 : i32, i32
  }
  func.func @transform_15(%arg0: i32) -> (i32, i32) {
    %c0_i32 = arith.constant 0 : i32
    %c0_i32_0 = arith.constant 0 : i32
    %c0_i32_1 = arith.constant 0 : i32
    return %c0_i32, %c0_i32_0 : i32, i32
  }
  func.func @transform_16(%arg0: i32) -> (i32, i32, i32) {
    %c0_i32 = arith.constant 0 : i32
    %c0_i32_0 = arith.constant 0 : i32
    %c0_i32_1 = arith.constant 0 : i32
    return %arg0, %c0_i32, %c0_i32_0 : i32, i32, i32
  }
  func.func @transform_17(%arg0: i32) -> (i32, i32, i32) {
    %c0_i32 = arith.constant 0 : i32
    %c0_i32_0 = arith.constant 0 : i32
    %c0_i32_1 = arith.constant 0 : i32
    return %arg0, %c0_i32, %c0_i32_0 : i32, i32, i32
  }
}

</mosaic_0001>

<llo_original>
// kernel: tpu_custom_call.1
$region0: #{tpu_custom_call.1}
  #allocation0 [shape = 'u32[]', space=smem, size = 0x4, offset = 0x4, fixed_abs, tag = 'smem constant byte address 0x4 - core index']
  #allocation1 [shape = 'u32[144,128]{1,0:T(1,128)}', space=vmem, size = 0x12000, scoped, tag = 'internal scratch']
  %s0 = inlined_call_operand.vmem [shape: f32[2,8,32], index: 0, kind: input, shape index: {}]
  %s1 = inlined_call_operand.vmem [shape: f32[2,8,32], index: 1, kind: input, shape index: {}]
  %s2 = inlined_call_operand.vmem [shape: f32[2,8,32], index: 2, kind: input, shape index: {}]
  %s3 = inlined_call_operand.vmem [shape: f32[2,8,32], index: 3, kind: input, shape index: {}]
  %s4 = inlined_call_operand.vmem [shape: f32[1,32], index: 4, kind: input, shape index: {}]
  %s5 = inlined_call_operand.vmem [shape: f32[1,32], index: 5, kind: input, shape index: {}]
  %s6 = inlined_call_operand.vmem [shape: bf16[32,32], index: 6, kind: input, shape index: {}]
  %s7 = inlined_call_operand.hbm [shape: bf16[32,64], index: 7, kind: input, shape index: {}]
  %s8 = inlined_call_operand.hbm [shape: bf16[32,32], index: 8, kind: input, shape index: {}]
  %s9 = inlined_call_operand.hbm [shape: f32[1,32], index: 9, kind: input, shape index: {}]
  %s10 = inlined_call_operand.vmem [shape: f32[1,32], index: 10, kind: input, shape index: {}]
  %s11 = inlined_call_operand.vmem [shape: f32[1,32], index: 11, kind: input, shape index: {}]
  %s12 = inlined_call_operand.vmem [shape: bf16[32,128], index: 12, kind: input, shape index: {}]
  %s13 = inlined_call_operand.vmem [shape: f32[1,128], index: 13, kind: input, shape index: {}]
  %s14 = inlined_call_operand.vmem [shape: bf16[128,32], index: 14, kind: input, shape index: {}]
  %s15 = inlined_call_operand.vmem [shape: f32[1,32], index: 15, kind: input, shape index: {}]
  %s16 = inlined_call_operand.hbm [shape: f32[2,8,32], index: 16, kind: output, shape index: {0}]
  %s17 = inlined_call_operand.hbm [shape: f32[2,8,32], index: 17, kind: output, shape index: {1}]
  %18 = xla_tuple %s16, %s17
  %s19 = sld [smem:[#allocation0]]
  $region117: #{tpu_custom_call.1} parent=0
    _
  %s21 = ssub.s32 1, %s19
  %s22 = scalar_select 0, %s21, %s19
  $region1: #{tpu_custom_call.1} parent=0
    #allocation2 [shape = 'u8[8192]{0}', space=vmem, size = 0x2000, scoped, tag = 'input window, operand 7, single buffered']
    #allocation3 [shape = 's32[2]{0}', space=sflag, size = 0x8, scoped, tag = 'scoped memory for tpu_custom_call.1']
    #allocation4 [shape = 's32[2]{0}', space=sflag, size = 0x8, scoped, tag = 'scoped memory for tpu_custom_call.1']
    #allocation5 [shape = 'u8[8192]{0}', space=vmem, size = 0x2000, scoped, tag = 'input window, operand 8, single buffered']
    #allocation6 [shape = 's32[1]{0}', space=sflag, size = 0x4, scoped, tag = 'scoped memory for tpu_custom_call.1']
    #allocation7 [shape = 'u8[512]{0}', space=vmem, size = 0x400, scoped, tag = 'input window, operand 9, single buffered']
    #allocation8 [shape = 'u8[8192]{0}', space=vmem, size = 0x2000, scoped, tag = 'output window, operand 0']
    #allocation9 [shape = 'u8[8192]{0}', space=vmem, size = 0x2000, scoped, tag = 'output window, operand 1']
    #allocation10 [shape = 's32[2]{0}', space=sflag, size = 0x8, scoped, tag = 'scoped memory for tpu_custom_call.1']
    %23 = vsyncpa [#allocation3], 0
    %24 = vsyncpa [#allocation6], 0
    %25 = vsyncpa [#allocation4], 0
    %s26 = scalar_lea.sflag [#allocation4], 1
    %27 = vsyncpa %s26, 0
    %28 = vsyncpa [#allocation10], 0
    %s29 = scalar_lea.sflag [#allocation10], 1
    %30 = vsyncpa %s29, 0
    loop: start=0, step=1, limit=4
    $region2: #{tpu_custom_call.1} parent=1 // loop_pre_header
      _
    $region3: #{tpu_custom_call.1} parent=1 // loop_header
      %s32 = sphi 0, %s36
      %p33 = scmp.ge.s32.totalorder %s32, 4
      %s42 = sphi 0, %s44
      %s45 = sphi 0, %s42
      %s46 = sphi 0, %s45
      %s62 = sphi 0, %s46
      %s68 = sphi 0, %s70
      %s71 = sphi 0, %s68
      %s72 = sphi 0, %s71
      %s88 = sphi 0, %s72
      %s94 = sphi 0, %s96
      %s97 = sphi 0, %s94
      %s98 = sphi 0, %s97
      %s114 = sphi 0, %s98
      %s120 = sphi 0, %s122
      %s123 = sphi 0, %s120
      %s124 = sphi 0, %s123
      %s140 = sphi 0, %s124
      %s144 = sphi 0, %s144
      %s146 = sphi 0, %s144
      %s147 = sphi 0, %s146
      %s161 = sphi 0, %s147
      %s165 = sphi 0, %s165
      %s167 = sphi 0, %s165
      %s168 = sphi 0, %s167
      %s182 = sphi 0, %s168
      %s186 = sphi 0, %s186
      %s188 = sphi 0, %s186
      %s189 = sphi 0, %s188
      %s203 = sphi 0, %s189
      %s207 = sphi 0, %s207
      %s209 = sphi 0, %s207
      %s210 = sphi 0, %s209
      %s224 = sphi 0, %s210
      %s228 = sphi 0, %s228
      %s230 = sphi 0, %s228
      %s231 = sphi 0, %s230
      %s245 = sphi 0, %s231
      %s249 = sphi 0, %s249
      %s251 = sphi 0, %s249
      %s252 = sphi 0, %s251
      %s266 = sphi 0, %s252
      %s270 = sphi 0, %s270
      %s272 = sphi 0, %s270
      %s273 = sphi 0, %s272
      %s287 = sphi 0, %s273
      %s291 = sphi 0, %s291
      %s293 = sphi 0, %s291
      %s294 = sphi 0, %s293
      %s308 = sphi 0, %s294
      %s312 = sphi 0, %s312
      %s314 = sphi 0, %s312
      %s315 = sphi 0, %s314
      %s329 = sphi 0, %s315
      %s333 = sphi 0, %s333
      %s335 = sphi 0, %s333
      %s336 = sphi 0, %s335
      %s350 = sphi 0, %s336
      %s354 = sphi 0, %s354
      %s356 = sphi 0, %s354
      %s357 = sphi 0, %s356
      %s371 = sphi 0, %s357
      %s375 = sphi 0, %s375
      %s377 = sphi 0, %s375
      %s378 = sphi 0, %s377
      %s392 = sphi 0, %s378
      %s398 = sphi 0, %s400
      %s401 = sphi 0, %s398
      %s402 = sphi 0, %s401
      %s418 = sphi 0, %s402
      %s424 = sphi 0, %s426
      %s427 = sphi 0, %s424
      %s428 = sphi 0, %s427
      %s444 = sphi 0, %s428
    $region4: #{tpu_custom_call.1} parent=1 // loop_header_branch
      %35 = sbr.rel (%p33) target = $region8
    $region5: #{tpu_custom_call.1} parent=1 // loop_body
      %s37 = ssub.s32 %s32, 1
      %s38 = ssub.s32 %s32, 2
      %s39 = sadd.s32 %s32, 1
      %s40 = ssub.s32 %s32, %s39
      %p41 = scmp.eq.s32.totalorder %s40, 0
      %s43 = sadd.s32 %s42, 1
      %s44 = scalar_select %p41, %s42, %s43
      %p47 = pneg %p41
      %p48 = scmp.eq.s32.totalorder %s32, 1
      %p49 = por %p47, %p48
      %p50 = scmp.ne.s32.totalorder %s42, %s45
      %p51 = scmp.eq.s32.totalorder %s32, 0
      %p52 = por %p50, %p51
      %p53 = scmp.ne.s32.totalorder %s42, %s45
      %p54 = scmp.eq.s32.totalorder %s37, 1
      %p55 = por %p53, %p54
      %p56 = scmp.ne.s32.totalorder %s45, %s46
      %p57 = scmp.eq.s32.totalorder %s37, 0
      %p58 = por %p56, %p57
      %p59 = scmp.ne.s32.totalorder %s45, %s46
      %p60 = scmp.eq.s32.totalorder %s38, 1
      %p61 = por %p59, %p60
      %p63 = scmp.ne.s32.totalorder %s46, %s62
      %p64 = scmp.eq.s32.totalorder %s38, 0
      %p65 = por %p63, %p64
      %s66 = ssub.s32 %s32, %s39
      %p67 = scmp.eq.s32.totalorder %s66, 0
      %s69 = sadd.s32 %s68, 1
      %s70 = scalar_select %p67, %s68, %s69
      %p73 = pneg %p67
      %p74 = scmp.eq.s32.totalorder %s32, 1
      %p75 = por %p73, %p74
      %p76 = scmp.ne.s32.totalorder %s68, %s71
      %p77 = scmp.eq.s32.totalorder %s32, 0
      %p78 = por %p76, %p77
      %p79 = scmp.ne.s32.totalorder %s68, %s71
      %p80 = scmp.eq.s32.totalorder %s37, 1
      %p81 = por %p79, %p80
      %p82 = scmp.ne.s32.totalorder %s71, %s72
      %p83 = scmp.eq.s32.totalorder %s37, 0
      %p84 = por %p82, %p83
      %p85 = scmp.ne.s32.totalorder %s71, %s72
      %p86 = scmp.eq.s32.totalorder %s38, 1
      %p87 = por %p85, %p86
      %p89 = scmp.ne.s32.totalorder %s72, %s88
      %p90 = scmp.eq.s32.totalorder %s38, 0
      %p91 = por %p89, %p90
      %s92 = ssub.s32 %s32, %s39
      %p93 = scmp.eq.s32.totalorder %s92, 0
      %s95 = sadd.s32 %s94, 1
      %s96 = scalar_select %p93, %s94, %s95
      %p99 = pneg %p93
      %p100 = scmp.eq.s32.totalorder %s32, 1
      %p101 = por %p99, %p100
      %p102 = scmp.ne.s32.totalorder %s94, %s97
      %p103 = scmp.eq.s32.totalorder %s32, 0
      %p104 = por %p102, %p103
      %p105 = scmp.ne.s32.totalorder %s94, %s97
      %p106 = scmp.eq.s32.totalorder %s37, 1
      %p107 = por %p105, %p106
      %p108 = scmp.ne.s32.totalorder %s97, %s98
      %p109 = scmp.eq.s32.totalorder %s37, 0
      %p110 = por %p108, %p109
      %p111 = scmp.ne.s32.totalorder %s97, %s98
      %p112 = scmp.eq.s32.totalorder %s38, 1
      %p113 = por %p111, %p112
      %p115 = scmp.ne.s32.totalorder %s98, %s114
      %p116 = scmp.eq.s32.totalorder %s38, 0
      %p117 = por %p115, %p116
      %s118 = ssub.s32 %s32, %s39
      %p119 = scmp.eq.s32.totalorder %s118, 0
      %s121 = sadd.s32 %s120, 1
      %s122 = scalar_select %p119, %s120, %s121
      %p125 = pneg %p119
      %p126 = scmp.eq.s32.totalorder %s32, 1
      %p127 = por %p125, %p126
      %p128 = scmp.ne.s32.totalorder %s120, %s123
      %p129 = scmp.eq.s32.totalorder %s32, 0
      %p130 = por %p128, %p129
      %p131 = scmp.ne.s32.totalorder %s120, %s123
      %p132 = scmp.eq.s32.totalorder %s37, 1
      %p133 = por %p131, %p132
      %p134 = scmp.ne.s32.totalorder %s123, %s124
      %p135 = scmp.eq.s32.totalorder %s37, 0
      %p136 = por %p134, %p135
      %p137 = scmp.ne.s32.totalorder %s123, %s124
      %p138 = scmp.eq.s32.totalorder %s38, 1
      %p139 = por %p137, %p138
      %p141 = scmp.ne.s32.totalorder %s124, %s140
      %p142 = scmp.eq.s32.totalorder %s38, 0
      %p143 = por %p141, %p142
      %s145 = sadd.s32 %s144, 1
      %p148 = scmp.eq.s32.totalorder %s32, 1
      %p149 = scmp.ne.s32.totalorder %s144, %s146
      %p150 = scmp.eq.s32.totalorder %s32, 0
      %p151 = por %p149, %p150
      %p152 = scmp.ne.s32.totalorder %s144, %s146
      %p153 = scmp.eq.s32.totalorder %s37, 1
      %p154 = por %p152, %p153
      %p155 = scmp.ne.s32.totalorder %s146, %s147
      %p156 = scmp.eq.s32.totalorder %s37, 0
      %p157 = por %p155, %p156
      %p158 = scmp.ne.s32.totalorder %s146, %s147
      %p159 = scmp.eq.s32.totalorder %s38, 1
      %p160 = por %p158, %p159
      %p162 = scmp.ne.s32.totalorder %s147, %s161
      %p163 = scmp.eq.s32.totalorder %s38, 0
      %p164 = por %p162, %p163
      %s166 = sadd.s32 %s165, 1
      %p169 = scmp.eq.s32.totalorder %s32, 1
      %p170 = scmp.ne.s32.totalorder %s165, %s167
      %p171 = scmp.eq.s32.totalorder %s32, 0
      %p172 = por %p170, %p171
      %p173 = scmp.ne.s32.totalorder %s165, %s167
      %p174 = scmp.eq.s32.totalorder %s37, 1
      %p175 = por %p173, %p174
      %p176 = scmp.ne.s32.totalorder %s167, %s168
      %p177 = scmp.eq.s32.totalorder %s37, 0
      %p178 = por %p176, %p177
      %p179 = scmp.ne.s32.totalorder %s167, %s168
      %p180 = scmp.eq.s32.totalorder %s38, 1
      %p181 = por %p179, %p180
      %p183 = scmp.ne.s32.totalorder %s168, %s182
      %p184 = scmp.eq.s32.totalorder %s38, 0
      %p185 = por %p183, %p184
      %s187 = sadd.s32 %s186, 1
      %p190 = scmp.eq.s32.totalorder %s32, 1
      %p191 = scmp.ne.s32.totalorder %s186, %s188
      %p192 = scmp.eq.s32.totalorder %s32, 0
      %p193 = por %p191, %p192
      %p194 = scmp.ne.s32.totalorder %s186, %s188
      %p195 = scmp.eq.s32.totalorder %s37, 1
      %p196 = por %p194, %p195
      %p197 = scmp.ne.s32.totalorder %s188, %s189
      %p198 = scmp.eq.s32.totalorder %s37, 0
      %p199 = por %p197, %p198
      %p200 = scmp.ne.s32.totalorder %s188, %s189
      %p201 = scmp.eq.s32.totalorder %s38, 1
      %p202 = por %p200, %p201
      %p204 = scmp.ne.s32.totalorder %s189, %s203
      %p205 = scmp.eq.s32.totalorder %s38, 0
      %p206 = por %p204, %p205
      %s208 = sadd.s32 %s207, 1
      %p211 = scmp.eq.s32.totalorder %s32, 1
      %p212 = scmp.ne.s32.totalorder %s207, %s209
      %p213 = scmp.eq.s32.totalorder %s32, 0
      %p214 = por %p212, %p213
      %p215 = scmp.ne.s32.totalorder %s207, %s209
      %p216 = scmp.eq.s32.totalorder %s37, 1
      %p217 = por %p215, %p216
      %p218 = scmp.ne.s32.totalorder %s209, %s210
      %p219 = scmp.eq.s32.totalorder %s37, 0
      %p220 = por %p218, %p219
      %p221 = scmp.ne.s32.totalorder %s209, %s210
      %p222 = scmp.eq.s32.totalorder %s38, 1
      %p223 = por %p221, %p222
      %p225 = scmp.ne.s32.totalorder %s210, %s224
      %p226 = scmp.eq.s32.totalorder %s38, 0
      %p227 = por %p225, %p226
      %s229 = sadd.s32 %s228, 1
      %p232 = scmp.eq.s32.totalorder %s32, 1
      %p233 = scmp.ne.s32.totalorder %s228, %s230
      %p234 = scmp.eq.s32.totalorder %s32, 0
      %p235 = por %p233, %p234
      %p236 = scmp.ne.s32.totalorder %s228, %s230
      %p237 = scmp.eq.s32.totalorder %s37, 1
      %p238 = por %p236, %p237
      %p239 = scmp.ne.s32.totalorder %s230, %s231
      %p240 = scmp.eq.s32.totalorder %s37, 0
      %p241 = por %p239, %p240
      %p242 = scmp.ne.s32.totalorder %s230, %s231
      %p243 = scmp.eq.s32.totalorder %s38, 1
      %p244 = por %p242, %p243
      %p246 = scmp.ne.s32.totalorder %s231, %s245
      %p247 = scmp.eq.s32.totalorder %s38, 0
      %p248 = por %p246, %p247
      %s250 = sadd.s32 %s249, 1
      %p253 = scmp.eq.s32.totalorder %s32, 1
      %p254 = scmp.ne.s32.totalorder %s249, %s251
      %p255 = scmp.eq.s32.totalorder %s32, 0
      %p256 = por %p254, %p255
      %p257 = scmp.ne.s32.totalorder %s249, %s251
      %p258 = scmp.eq.s32.totalorder %s37, 1
      %p259 = por %p257, %p258
      %p260 = scmp.ne.s32.totalorder %s251, %s252
      %p261 = scmp.eq.s32.totalorder %s37, 0
      %p262 = por %p260, %p261
      %p263 = scmp.ne.s32.totalorder %s251, %s252
      %p264 = scmp.eq.s32.totalorder %s38, 1
      %p265 = por %p263, %p264
      %p267 = scmp.ne.s32.totalorder %s252, %s266
      %p268 = scmp.eq.s32.totalorder %s38, 0
      %p269 = por %p267, %p268
      %s271 = sadd.s32 %s270, 1
      %p274 = scmp.eq.s32.totalorder %s32, 1
      %p275 = scmp.ne.s32.totalorder %s270, %s272
      %p276 = scmp.eq.s32.totalorder %s32, 0
      %p277 = por %p275, %p276
      %p278 = scmp.ne.s32.totalorder %s270, %s272
      %p279 = scmp.eq.s32.totalorder %s37, 1
      %p280 = por %p278, %p279
      %p281 = scmp.ne.s32.totalorder %s272, %s273
      %p282 = scmp.eq.s32.totalorder %s37, 0
      %p283 = por %p281, %p282
      %p284 = scmp.ne.s32.totalorder %s272, %s273
      %p285 = scmp.eq.s32.totalorder %s38, 1
      %p286 = por %p284, %p285
      %p288 = scmp.ne.s32.totalorder %s273, %s287
      %p289 = scmp.eq.s32.totalorder %s38, 0
      %p290 = por %p288, %p289
      %s292 = sadd.s32 %s291, 1
      %p295 = scmp.eq.s32.totalorder %s32, 1
      %p296 = scmp.ne.s32.totalorder %s291, %s293
      %p297 = scmp.eq.s32.totalorder %s32, 0
      %p298 = por %p296, %p297
      %p299 = scmp.ne.s32.totalorder %s291, %s293
      %p300 = scmp.eq.s32.totalorder %s37, 1
      %p301 = por %p299, %p300
      %p302 = scmp.ne.s32.totalorder %s293, %s294
      %p303 = scmp.eq.s32.totalorder %s37, 0
      %p304 = por %p302, %p303
      %p305 = scmp.ne.s32.totalorder %s293, %s294
      %p306 = scmp.eq.s32.totalorder %s38, 1
      %p307 = por %p305, %p306
      %p309 = scmp.ne.s32.totalorder %s294, %s308
      %p310 = scmp.eq.s32.totalorder %s38, 0
      %p311 = por %p309, %p310
      %s313 = sadd.s32 %s312, 1
      %p316 = scmp.eq.s32.totalorder %s32, 1
      %p317 = scmp.ne.s32.totalorder %s312, %s314
      %p318 = scmp.eq.s32.totalorder %s32, 0
      %p319 = por %p317, %p318
      %p320 = scmp.ne.s32.totalorder %s312, %s314
      %p321 = scmp.eq.s32.totalorder %s37, 1
      %p322 = por %p320, %p321
      %p323 = scmp.ne.s32.totalorder %s314, %s315
      %p324 = scmp.eq.s32.totalorder %s37, 0
      %p325 = por %p323, %p324
      %p326 = scmp.ne.s32.totalorder %s314, %s315
      %p327 = scmp.eq.s32.totalorder %s38, 1
      %p328 = por %p326, %p327
      %p330 = scmp.ne.s32.totalorder %s315, %s329
      %p331 = scmp.eq.s32.totalorder %s38, 0
      %p332 = por %p330, %p331
      %s334 = sadd.s32 %s333, 1
      %p337 = scmp.eq.s32.totalorder %s32, 1
      %p338 = scmp.ne.s32.totalorder %s333, %s335
      %p339 = scmp.eq.s32.totalorder %s32, 0
      %p340 = por %p338, %p339
      %p341 = scmp.ne.s32.totalorder %s333, %s335
      %p342 = scmp.eq.s32.totalorder %s37, 1
      %p343 = por %p341, %p342
      %p344 = scmp.ne.s32.totalorder %s335, %s336
      %p345 = scmp.eq.s32.totalorder %s37, 0
      %p346 = por %p344, %p345
      %p347 = scmp.ne.s32.totalorder %s335, %s336
      %p348 = scmp.eq.s32.totalorder %s38, 1
      %p349 = por %p347, %p348
      %p351 = scmp.ne.s32.totalorder %s336, %s350
      %p352 = scmp.eq.s32.totalorder %s38, 0
      %p353 = por %p351, %p352
      %s355 = sadd.s32 %s354, 1
      %p358 = scmp.eq.s32.totalorder %s32, 1
      %p359 = scmp.ne.s32.totalorder %s354, %s356
      %p360 = scmp.eq.s32.totalorder %s32, 0
      %p361 = por %p359, %p360
      %p362 = scmp.ne.s32.totalorder %s354, %s356
      %p363 = scmp.eq.s32.totalorder %s37, 1
      %p364 = por %p362, %p363
      %p365 = scmp.ne.s32.totalorder %s356, %s357
      %p366 = scmp.eq.s32.totalorder %s37, 0
      %p367 = por %p365, %p366
      %p368 = scmp.ne.s32.totalorder %s356, %s357
      %p369 = scmp.eq.s32.totalorder %s38, 1
      %p370 = por %p368, %p369
      %p372 = scmp.ne.s32.totalorder %s357, %s371
      %p373 = scmp.eq.s32.totalorder %s38, 0
      %p374 = por %p372, %p373
      %s376 = sadd.s32 %s375, 1
      %p379 = scmp.eq.s32.totalorder %s32, 1
      %p380 = scmp.ne.s32.totalorder %s375, %s377
      %p381 = scmp.eq.s32.totalorder %s32, 0
      %p382 = por %p380, %p381
      %p383 = scmp.ne.s32.totalorder %s375, %s377
      %p384 = scmp.eq.s32.totalorder %s37, 1
      %p385 = por %p383, %p384
      %p386 = scmp.ne.s32.totalorder %s377, %s378
      %p387 = scmp.eq.s32.totalorder %s37, 0
      %p388 = por %p386, %p387
      %p389 = scmp.ne.s32.totalorder %s377, %s378
      %p390 = scmp.eq.s32.totalorder %s38, 1
      %p391 = por %p389, %p390
      %p393 = scmp.ne.s32.totalorder %s378, %s392
      %p394 = scmp.eq.s32.totalorder %s38, 0
      %p395 = por %p393, %p394
      %s396 = ssub.s32 %s32, %s39
      %p397 = scmp.eq.s32.totalorder %s396, 0
      %s399 = sadd.s32 %s398, 1
      %s400 = scalar_select %p397, %s398, %s399
      %p403 = pneg %p397
      %p404 = scmp.eq.s32.totalorder %s32, 1
      %p405 = por %p403, %p404
      %p406 = scmp.ne.s32.totalorder %s398, %s401
      %p407 = scmp.eq.s32.totalorder %s32, 0
      %p408 = por %p406, %p407
      %p409 = scmp.ne.s32.totalorder %s398, %s401
      %p410 = scmp.eq.s32.totalorder %s37, 1
      %p411 = por %p409, %p410
      %p412 = scmp.ne.s32.totalorder %s401, %s402
      %p413 = scmp.eq.s32.totalorder %s37, 0
      %p414 = por %p412, %p413
      %p415 = scmp.ne.s32.totalorder %s401, %s402
      %p416 = scmp.eq.s32.totalorder %s38, 1
      %p417 = por %p415, %p416
      %p419 = scmp.ne.s32.totalorder %s402, %s418
      %p420 = scmp.eq.s32.totalorder %s38, 0
      %p421 = por %p419, %p420
      %s422 = ssub.s32 %s32, %s39
      %p423 = scmp.eq.s32.totalorder %s422, 0
      %s425 = sadd.s32 %s424, 1
      %s426 = scalar_select %p423, %s424, %s425
      %p429 = pneg %p423
      %p430 = scmp.eq.s32.totalorder %s32, 1
      %p431 = por %p429, %p430
      %p432 = scmp.ne.s32.totalorder %s424, %s427
      %p433 = scmp.eq.s32.totalorder %s32, 0
      %p434 = por %p432, %p433
      %p435 = scmp.ne.s32.totalorder %s424, %s427
      %p436 = scmp.eq.s32.totalorder %s37, 1
      %p437 = por %p435, %p436
      %p438 = scmp.ne.s32.totalorder %s427, %s428
      %p439 = scmp.eq.s32.totalorder %s37, 0
      %p440 = por %p438, %p439
      %p441 = scmp.ne.s32.totalorder %s427, %s428
      %p442 = scmp.eq.s32.totalorder %s38, 1
      %p443 = por %p441, %p442
      %p445 = scmp.ne.s32.totalorder %s428, %s444
      %p446 = scmp.eq.s32.totalorder %s38, 0
      %p447 = por %p445, %p446
      %p448 = scmp.le.s32.totalorder 1, %s32
      %p449 = scmp.lt.s32.totalorder %s32, 3
      %p450 = pnand %p448, %p449
      %p451 = pneg %p450
      // Predicated region
      $region9: #{tpu_custom_call.1} parent=5 // pred_check
        _
      $region10: #{tpu_custom_call.1} parent=5 // pred_check_branch
        %453 = sbr.rel (%p450) target = $region12
      $region11: #{tpu_custom_call.1} parent=5 // pred_region
        %s454 = ssub.s32 %s32, 1
        // Predicated region
        $region13: #{tpu_custom_call.1} parent=11 // pred_check
          %p455 = pneg %p157
        $region14: #{tpu_custom_call.1} parent=11 // pred_check_branch
          %457 = sbr.rel (%p455) target = $region16
        $region15: #{tpu_custom_call.1} parent=11 // pred_region
          _
        $region16: #{tpu_custom_call.1} parent=11 // pred_fallthru
          _
        // Predicated region
        $region17: #{tpu_custom_call.1} parent=11 // pred_check
          %p458 = pneg %p178
        $region18: #{tpu_custom_call.1} parent=11 // pred_check_branch
          %460 = sbr.rel (%p458) target = $region20
        $region19: #{tpu_custom_call.1} parent=11 // pred_region
          _
        $region20: #{tpu_custom_call.1} parent=11 // pred_fallthru
          _
        // Predicated region
        $region21: #{tpu_custom_call.1} parent=11 // pred_check
          %p461 = pneg %p199
        $region22: #{tpu_custom_call.1} parent=11 // pred_check_branch
          %463 = sbr.rel (%p461) target = $region24
        $region23: #{tpu_custom_call.1} parent=11 // pred_region
          _
        $region24: #{tpu_custom_call.1} parent=11 // pred_fallthru
          _
        // Predicated region
        $region25: #{tpu_custom_call.1} parent=11 // pred_check
          %p464 = pneg %p220
        $region26: #{tpu_custom_call.1} parent=11 // pred_check_branch
          %466 = sbr.rel (%p464) target = $region28
        $region27: #{tpu_custom_call.1} parent=11 // pred_region
          %s468 = ssub.s32 256, 256
          %469 = vsyncadd [#allocation3], %s468
          %s470 = sshll.u32 [#allocation2], 4
          %s471 = int_to_ptr.vmem [resolvable:$true] %s470
          %476 = dma.hbm_to_vmem [thread:$0]  %s7, 256, %s471, [#allocation3], 64, 64, 4
        $region28: #{tpu_custom_call.1} parent=11 // pred_fallthru
          _
        // Predicated region
        $region29: #{tpu_custom_call.1} parent=11 // pred_check
          %p477 = pneg %p241
        $region30: #{tpu_custom_call.1} parent=11 // pred_check_branch
          %479 = sbr.rel (%p477) target = $region32
        $region31: #{tpu_custom_call.1} parent=11 // pred_region
          %s481 = ssub.s32 256, 256
          %482 = vsyncadd [#allocation6], %s481
          %s483 = sshll.u32 [#allocation5], 4
          %s484 = int_to_ptr.vmem [resolvable:$true] %s483
          %489 = dma.hbm_to_vmem [thread:$0]  %s8, 256, %s484, [#allocation6], 64, 64, 4
        $region32: #{tpu_custom_call.1} parent=11 // pred_fallthru
          _
        // Predicated region
        $region33: #{tpu_custom_call.1} parent=11 // pred_check
          %p490 = pneg %p262
        $region34: #{tpu_custom_call.1} parent=11 // pred_check_branch
          %492 = sbr.rel (%p490) target = $region36
        $region35: #{tpu_custom_call.1} parent=11 // pred_region
          %s494 = ssub.s32 16, 16
          %495 = vsyncadd [#allocation6], %s494
          %s497 = sshll.u32 [#allocation7], 4
          %s498 = int_to_ptr.vmem [resolvable:$true] %s497
          %500 = dma.hbm_to_vmem [thread:$0]  %s9, 16, %s498, [#allocation6]
        $region36: #{tpu_custom_call.1} parent=11 // pred_fallthru
          _
        // Predicated region
        $region37: #{tpu_custom_call.1} parent=11 // pred_check
          %p501 = pneg %p283
        $region38: #{tpu_custom_call.1} parent=11 // pred_check_branch
          %503 = sbr.rel (%p501) target = $region40
        $region39: #{tpu_custom_call.1} parent=11 // pred_region
          _
        $region40: #{tpu_custom_call.1} parent=11 // pred_fallthru
          _
        // Predicated region
        $region41: #{tpu_custom_call.1} parent=11 // pred_check
          %p504 = pneg %p304
        $region42: #{tpu_custom_call.1} parent=11 // pred_check_branch
          %506 = sbr.rel (%p504) target = $region44
        $region43: #{tpu_custom_call.1} parent=11 // pred_region
          _
        $region44: #{tpu_custom_call.1} parent=11 // pred_fallthru
          _
        // Predicated region
        $region45: #{tpu_custom_call.1} parent=11 // pred_check
          %p507 = pneg %p325
        $region46: #{tpu_custom_call.1} parent=11 // pred_check_branch
          %509 = sbr.rel (%p507) target = $region48
        $region47: #{tpu_custom_call.1} parent=11 // pred_region
          _
        $region48: #{tpu_custom_call.1} parent=11 // pred_fallthru
          _
        // Predicated region
        $region49: #{tpu_custom_call.1} parent=11 // pred_check
          %p510 = pneg %p346
        $region50: #{tpu_custom_call.1} parent=11 // pred_check_branch
          %512 = sbr.rel (%p510) target = $region52
        $region51: #{tpu_custom_call.1} parent=11 // pred_region
          _
        $region52: #{tpu_custom_call.1} parent=11 // pred_fallthru
          _
        // Predicated region
        $region53: #{tpu_custom_call.1} parent=11 // pred_check
          %p513 = pneg %p367
        $region54: #{tpu_custom_call.1} parent=11 // pred_check_branch
          %515 = sbr.rel (%p513) target = $region56
        $region55: #{tpu_custom_call.1} parent=11 // pred_region
          _
        $region56: #{tpu_custom_call.1} parent=11 // pred_fallthru
          _
        // Predicated region
        $region57: #{tpu_custom_call.1} parent=11 // pred_check
          %p516 = pneg %p388
        $region58: #{tpu_custom_call.1} parent=11 // pred_check_branch
          %518 = sbr.rel (%p516) target = $region60
        $region59: #{tpu_custom_call.1} parent=11 // pred_region
          _
        $region60: #{tpu_custom_call.1} parent=11 // pred_fallthru
          _
      $region12: #{tpu_custom_call.1} parent=5 // pred_fallthru
        _
      %p519 = scmp.lt.s32.totalorder %s32, 2
      // Predicated region
      $region61: #{tpu_custom_call.1} parent=5 // pred_check
        %p520 = pneg %p519
      $region62: #{tpu_custom_call.1} parent=5 // pred_check_branch
        %522 = sbr.rel (%p520) target = $region64
      $region63: #{tpu_custom_call.1} parent=5 // pred_region
        // Predicated region
        $region65: #{tpu_custom_call.1} parent=63 // pred_check
          %p523 = pneg %p52
        $region66: #{tpu_custom_call.1} parent=63 // pred_check_branch
          %525 = sbr.rel (%p523) target = $region68
        $region67: #{tpu_custom_call.1} parent=63 // pred_region
          %p526 = scmp.lt.s32.totalorder %s32, 1
          %s527 = scalar_select %p526, %s32, 1
          %s528 = smul.addr %s527, 8
          %s529 = scalar_lea.vmem %s0, %s528
        $region68: #{tpu_custom_call.1} parent=63 // pred_fallthru
          _
        // Predicated region
        $region69: #{tpu_custom_call.1} parent=63 // pred_check
          %p530 = pneg %p78
        $region70: #{tpu_custom_call.1} parent=63 // pred_check_branch
          %532 = sbr.rel (%p530) target = $region72
        $region71: #{tpu_custom_call.1} parent=63 // pred_region
          %p533 = scmp.lt.s32.totalorder %s32, 1
          %s534 = scalar_select %p533, %s32, 1
          %s535 = smul.addr %s534, 8
          %s536 = scalar_lea.vmem %s1, %s535
        $region72: #{tpu_custom_call.1} parent=63 // pred_fallthru
          _
        // Predicated region
        $region73: #{tpu_custom_call.1} parent=63 // pred_check
          %p537 = pneg %p104
        $region74: #{tpu_custom_call.1} parent=63 // pred_check_branch
          %539 = sbr.rel (%p537) target = $region76
        $region75: #{tpu_custom_call.1} parent=63 // pred_region
          %p540 = scmp.lt.s32.totalorder %s32, 1
          %s541 = scalar_select %p540, %s32, 1
          %s542 = smul.addr %s541, 8
          %s543 = scalar_lea.vmem %s2, %s542
        $region76: #{tpu_custom_call.1} parent=63 // pred_fallthru
          _
        // Predicated region
        $region77: #{tpu_custom_call.1} parent=63 // pred_check
          %p544 = pneg %p130
        $region78: #{tpu_custom_call.1} parent=63 // pred_check_branch
          %546 = sbr.rel (%p544) target = $region80
        $region79: #{tpu_custom_call.1} parent=63 // pred_region
          %p547 = scmp.lt.s32.totalorder %s32, 1
          %s548 = scalar_select %p547, %s32, 1
          %s549 = smul.addr %s548, 8
          %s550 = scalar_lea.vmem %s3, %s549
        $region80: #{tpu_custom_call.1} parent=63 // pred_fallthru
          _
      $region64: #{tpu_custom_call.1} parent=5 // pred_fallthru
        _
      %p551 = scmp.le.s32.totalorder 1, %s32
      %p552 = scmp.lt.s32.totalorder %s32, 3
      %p553 = pnand %p551, %p552
      %p554 = pneg %p553
      // Predicated region
      $region81: #{tpu_custom_call.1} parent=5 // pred_check
        _
      $region82: #{tpu_custom_call.1} parent=5 // pred_check_branch
        %556 = sbr.rel (%p553) target = $region84
      $region83: #{tpu_custom_call.1} parent=5 // pred_region
        %s557 = ssub.s32 %s32, 1
        // Predicated region
        $region85: #{tpu_custom_call.1} parent=83 // pred_check
          %p558 = pneg %p220
        $region86: #{tpu_custom_call.1} parent=83 // pred_check_branch
          %560 = sbr.rel (%p558) target = $region88
        $region87: #{tpu_custom_call.1} parent=83 // pred_region
          %561 = dma.done [#allocation3], 256
        $region88: #{tpu_custom_call.1} parent=83 // pred_fallthru
          _
        // Predicated region
        $region89: #{tpu_custom_call.1} parent=83 // pred_check
          %p562 = pneg %p241
        $region90: #{tpu_custom_call.1} parent=83 // pred_check_branch
          %564 = sbr.rel (%p562) target = $region92
        $region91: #{tpu_custom_call.1} parent=83 // pred_region
          %565 = dma.done [#allocation6], 256
        $region92: #{tpu_custom_call.1} parent=83 // pred_fallthru
          _
        // Predicated region
        $region93: #{tpu_custom_call.1} parent=83 // pred_check
          %p566 = pneg %p262
        $region94: #{tpu_custom_call.1} parent=83 // pred_check_branch
          %568 = sbr.rel (%p566) target = $region96
        $region95: #{tpu_custom_call.1} parent=83 // pred_region
          %569 = dma.done [#allocation6], 16
        $region96: #{tpu_custom_call.1} parent=83 // pred_fallthru
          _
        %p570 = scmp.lt.s32.totalorder %s37, 1
        %s571 = scalar_select %p570, %s37, 1
        %s572 = smul.addr %s571, 8
        %s573 = scalar_lea.vmem %s0, %s572
        %p574 = pneg %p58
        %p575 = pneg %p55
        %p576 = scmp.lt.s32.totalorder %s37, 1
        %s577 = scalar_select %p576, %s37, 1
        %s578 = smul.addr %s577, 8
        %s579 = scalar_lea.vmem %s1, %s578
        %p580 = pneg %p84
        %p581 = pneg %p81
        %p582 = scmp.lt.s32.totalorder %s37, 1
        %s583 = scalar_select %p582, %s37, 1
        %s584 = smul.addr %s583, 8
        %s585 = scalar_lea.vmem %s2, %s584
        %p586 = pneg %p110
        %p587 = pneg %p107
        %p588 = scmp.lt.s32.totalorder %s37, 1
        %s589 = scalar_select %p588, %s37, 1
        %s590 = smul.addr %s589, 8
        %s591 = scalar_lea.vmem %s3, %s590
        %p592 = pneg %p136
        %p593 = pneg %p133
        %p594 = pneg %p157
        %p595 = pneg %p154
        %p596 = pneg %p178
        %p597 = pneg %p175
        %p598 = pneg %p199
        %p599 = pneg %p196
        %p600 = pneg %p220
        %p601 = pneg %p217
        %p602 = pneg %p241
        %p603 = pneg %p238
        %p604 = pneg %p262
        %p605 = pneg %p259
        %p606 = pneg %p283
        %p607 = pneg %p280
        %p608 = pneg %p304
        %p609 = pneg %p301
        %p610 = pneg %p325
        %p611 = pneg %p322
        %p612 = pneg %p346
        %p613 = pneg %p343
        %p614 = pneg %p367
        %p615 = pneg %p364
        %p616 = pneg %p388
        %p617 = pneg %p385
        %p618 = pneg %p414
        %p619 = pneg %p411
        %s620 = sand.u32 %s401, 1
        %s621 = scalar_lea.sflag [#allocation4], %s620
        %s622 = sand.u32 %s401, 1
        %s623 = smul.addr %s622, 8
        %s624 = scalar_lea.vmem [#allocation8], %s623
        %p625 = pneg %p440
        %p626 = pneg %p437
        %s627 = sand.u32 %s427, 1
        %s628 = scalar_lea.sflag [#allocation10], %s627
        %s629 = sand.u32 %s427, 1
        %s630 = smul.addr %s629, 8
        %s631 = scalar_lea.vmem [#allocation9], %s630
        %p632 = scmp.lt.s32.totalorder %s37, 1
        %s633 = scalar_select %p632, %s37, 1
        %s634 = smul.addr %s633, 8
        %s635 = scalar_lea.vmem %s0, %s634
        %p636 = scmp.lt.s32.totalorder %s37, 1
        %s637 = scalar_select %p636, %s37, 1
        %s638 = smul.addr %s637, 8
        %s639 = scalar_lea.vmem %s1, %s638
        %p640 = scmp.lt.s32.totalorder %s37, 1
        %s641 = scalar_select %p640, %s37, 1
        %s642 = smul.addr %s641, 8
        %s643 = scalar_lea.vmem %s2, %s642
        %p644 = scmp.lt.s32.totalorder %s37, 1
        %s645 = scalar_select %p644, %s37, 1
        %s646 = smul.addr %s645, 8
        %s647 = scalar_lea.vmem %s3, %s646
        %v649 = vld [vmem:[%s635] sm:$0xff]
        %v650 = vld [vmem:[%s639] sm:$0xff]
        %v651 = vld [vmem:[%s643] sm:$0xff]
        %v652 = vld [vmem:[%s647] sm:$0xff]
        %v653 = vld [vmem:[%s4] sm:$0x1]
        %v654 = vld [vmem:[%s5] sm:$0x1]
        %vm655 = vcmask 261120
        %v656 = vsel %vm655, %v649, 0.0
        %657 = vadd.xlane.f32.xlu0 %v656
        %v658 = vpop.xlane.xlu0 %657
        %v659 = vsel %vm655, %v650, 0.0
        %660 = vadd.xlane.f32.xlu0 %v659
        %v661 = vpop.xlane.xlu0 %660
        %v662 = vrcp.pop 32.0
        %v663 = vmul.f32 %v658, %v662
        %v664 = vmul.f32 %v661, %v662
        %v665 = vsub.f32 %v649, %v663
        %v666 = vsub.f32 %v650, %v664
        %v667 = vmul.f32 %v665, %v665
        %v668 = vmul.f32 %v666, %v666
        %v669 = vsel %vm655, %v667, 0.0
        %670 = vadd.xlane.f32.xlu0 %v669
        %v671 = vpop.xlane.xlu0 %670
        %v672 = vsel %vm655, %v668, 0.0
        %673 = vadd.xlane.f32.xlu0 %v672
        %v674 = vpop.xlane.xlu0 %673
        %v675 = vmul.f32 %v671, %v662
        %v676 = vmul.f32 %v674, %v662
        %v677 = vadd.f32 %v675, 1e-05
        %v678 = vadd.f32 %v676, 1e-05
        %v679 = vrsqrt.pop %v677
        %v680 = vrsqrt.pop %v678
        %v681 = vmul.f32 %v665, %v679
        %v682 = vmul.f32 %v666, %v680
        %v684 = vlaneseq
        %v685 = vshrl.u32 %v684, 7
        %v686 = vsub.s32 0, %v685
        %v687 = vrot.slane %v653, %v686
        %v689 = vmul.f32 %v681, %v687
        %v690 = vmul.f32 %v682, %v687
        %v692 = vlaneseq
        %v693 = vshrl.u32 %v692, 7
        %v694 = vsub.s32 0, %v693
        %v695 = vrot.slane %v654, %v694
        %v697 = vadd.f32 %v689, %v695
        %v698 = vadd.f32 %v690, %v695
        %v699 = vsel %vm655, %v651, 0.0
        %700 = vadd.xlane.f32.xlu0 %v699
        %v701 = vpop.xlane.xlu0 %700
        %v702 = vsel %vm655, %v652, 0.0
        %703 = vadd.xlane.f32.xlu0 %v702
        %v704 = vpop.xlane.xlu0 %703
        %v705 = vmul.f32 %v701, %v662
        %v706 = vmul.f32 %v704, %v662
        %v707 = vsub.f32 %v651, %v705
        %v708 = vsub.f32 %v652, %v706
        %v709 = vmul.f32 %v707, %v707
        %v710 = vmul.f32 %v708, %v708
        %v711 = vsel %vm655, %v709, 0.0
        %712 = vadd.xlane.f32.xlu0 %v711
        %v713 = vpop.xlane.xlu0 %712
        %v714 = vsel %vm655, %v710, 0.0
        %715 = vadd.xlane.f32.xlu0 %v714
        %v716 = vpop.xlane.xlu0 %715
        %v717 = vmul.f32 %v713, %v662
        %v718 = vmul.f32 %v716, %v662
        %v719 = vadd.f32 %v717, 1e-05
        %v720 = vadd.f32 %v718, 1e-05
        %v721 = vrsqrt.pop %v719
        %v722 = vrsqrt.pop %v720
        %v723 = vmul.f32 %v707, %v721
        %v724 = vmul.f32 %v708, %v722
        %v725 = vmul.f32 %v723, %v687
        %v726 = vmul.f32 %v724, %v687
        %v727 = vadd.f32 %v725, %v695
        %v728 = vadd.f32 %v726, %v695
        %v729 = vpack.c.bf16 %v698, %v697
        %v730 = vld [vmem:[%s6] sm:$0xf]
        %v731 = vld [vmem:[%s6 + $0x4] sm:$0xf]
        %v732 = vld [vmem:[%s6 + $0x8] sm:$0xf]
        %v733 = vld [vmem:[%s6 + $0xc] sm:$0xf]
        %v738 = vunpack.c.l.b16 %v730
        %v739 = vunpack.c.l.b16 %v731
        %v740 = vunpack.c.l.b16 %v732
        %v741 = vunpack.c.l.b16 %v733
        %v742 = vpack.c.b16 %v739, %v738
        %v743 = vpack.c.b16 %v741, %v740
        %v747 = vsel %vm655, %v729, 0
        %749 = vmatprep.subr.bf16.mxu0 0
        %750 = vmatpush1.bf16.msra.mxu0 %v742
        %751 = vmatprep.subr.bf16.mxu0 0
        %752 = vmatpush1.bf16.msra.mxu0 %v743
        %753 = vmatprep.subr.bf16.mxu0 0
        %754 = vmatpush1.bf16.msra.mxu0 0
        %755 = vmatprep.subr.bf16.mxu0 0
        %756 = vmatpush1.bf16.msra.mxu0 0
        %757 = vmatprep.subr.bf16.mxu0 0
        %758 = vmatpush1.bf16.msra.mxu0 0
        %759 = vmatprep.subr.bf16.mxu0 0
        %760 = vmatpush1.bf16.msra.mxu0 0
        %761 = vmatprep.subr.bf16.mxu0 0
        %762 = vmatpush1.bf16.msra.mxu0 0
        %763 = vmatprep.subr.bf16.mxu0 0
        %764 = vmatpush1.bf16.msra.mxu0 0
        %765 = vmatprep.subr.bf16.mxu0 0
        %766 = vmatpush1.bf16.msra.mxu0 0
        %767 = vmatprep.subr.bf16.mxu0 0
        %768 = vmatpush1.bf16.msra.mxu0 0
        %769 = vmatprep.subr.bf16.mxu0 0
        %770 = vmatpush1.bf16.msra.mxu0 0
        %771 = vmatprep.subr.bf16.mxu0 0
        %772 = vmatpush1.bf16.msra.mxu0 0
        %773 = vmatprep.subr.bf16.mxu0 0
        %774 = vmatpush1.bf16.msra.mxu0 0
        %775 = vmatprep.subr.bf16.mxu0 0
        %776 = vmatpush1.bf16.msra.mxu0 0
        %777 = vmatprep.subr.bf16.mxu0 0
        %778 = vmatpush1.bf16.msra.mxu0 0
        %779 = vmatprep.subr.bf16.mxu0 0
        %780 = vmatpush1.bf16.msra.mxu0 0
        %781 = vmatprep.mubr.bf16.mxu0 0
        %782 = vmatmul.mubr.bf16.gmra.mrb[0].mxu0 %v747
        %v783 = vpop.f32.mrb[0].mxu0
        %v784 = vadd.f32 0.0, %v783
        %v785 = vpop.f32.mrb[0].mxu0
        %v786 = vpop.f32.mrb[0].mxu0
        %v787 = vadd.f32 0.0, %v786
        %v788 = vpop.f32.mrb[0].mxu0
        %789 = vdwg.mxu0
        %v790 = vpack.c.bf16 %v728, %v727
        %v791 = vld [vmem:[#allocation2] sm:$0xf]
        %v792 = vld [vmem:[#allocation2 + $0x4] sm:$0xf]
        %v793 = vld [vmem:[#allocation2 + $0x8] sm:$0xf]
        %v794 = vld [vmem:[#allocation2 + $0xc] sm:$0xf]
        %v799 = vunpack.c.l.b16 %v791
        %v800 = vunpack.c.l.b16 %v792
        %v801 = vunpack.c.l.b16 %v793
        %v802 = vunpack.c.l.b16 %v794
        %v803 = vpack.c.b16 %v800, %v799
        %v804 = vpack.c.b16 %v802, %v801
        %v808 = vsel %vm655, %v790, 0
        %810 = vmatprep.subr.bf16.mxu0 0
        %811 = vmatpush1.bf16.msra.mxu0 %v803
        %812 = vmatprep.subr.bf16.mxu0 0
        %813 = vmatpush1.bf16.msra.mxu0 %v804
        %814 = vmatprep.subr.bf16.mxu0 0
        %815 = vmatpush1.bf16.msra.mxu0 0
        %816 = vmatprep.subr.bf16.mxu0 0
        %817 = vmatpush1.bf16.msra.mxu0 0
        %818 = vmatprep.subr.bf16.mxu0 0
        %819 = vmatpush1.bf16.msra.mxu0 0
        %820 = vmatprep.subr.bf16.mxu0 0
        %821 = vmatpush1.bf16.msra.mxu0 0
        %822 = vmatprep.subr.bf16.mxu0 0
        %823 = vmatpush1.bf16.msra.mxu0 0
        %824 = vmatprep.subr.bf16.mxu0 0
        %825 = vmatpush1.bf16.msra.mxu0 0
        %826 = vmatprep.subr.bf16.mxu0 0
        %827 = vmatpush1.bf16.msra.mxu0 0
        %828 = vmatprep.subr.bf16.mxu0 0
        %829 = vmatpush1.bf16.msra.mxu0 0
        %830 = vmatprep.subr.bf16.mxu0 0
        %831 = vmatpush1.bf16.msra.mxu0 0
        %832 = vmatprep.subr.bf16.mxu0 0
        %833 = vmatpush1.bf16.msra.mxu0 0
        %834 = vmatprep.subr.bf16.mxu0 0
        %835 = vmatpush1.bf16.msra.mxu0 0
        %836 = vmatprep.subr.bf16.mxu0 0
        %837 = vmatpush1.bf16.msra.mxu0 0
        %838 = vmatprep.subr.bf16.mxu0 0
        %839 = vmatpush1.bf16.msra.mxu0 0
        %840 = vmatprep.subr.bf16.mxu0 0
        %841 = vmatpush1.bf16.msra.mxu0 0
        %842 = vmatprep.mubr.bf16.mxu0 0
        %843 = vmatmul.mubr.bf16.gmra.mrb[0].mxu0 %v808
        %v844 = vpop.f32.mrb[0].mxu0
        %v845 = vadd.f32 0.0, %v844
        %v846 = vpop.f32.mrb[0].mxu0
        %v847 = vpop.f32.mrb[0].mxu0
        %v848 = vadd.f32 0.0, %v847
        %v849 = vpop.f32.mrb[0].mxu0
        %850 = vdwg.mxu0
        %v851 = vld [vmem:[#allocation7] sm:$0x1]
        %v852 = vpack.c.bf16 %v784, %v784
        %v853 = vpack.c.bf16 %v848, %v845
        %vm854 = vcmask 64512
        %v856 = vsel %vm854, %v852, 0
        %v859 = vsel %vm854, %v853, 0
        %861 = vmatprep.subr.bf16.mxu0 0
        %862 = vmatpush1.bf16.xpose.msra.mxu0 %v859
        %863 = vmatprep.subr.bf16.mxu0 0
        %864 = vmatpush1.bf16.xpose.msra.mxu0 0
        %865 = vmatprep.subr.bf16.mxu0 0
        %866 = vmatpush1.bf16.xpose.msra.mxu0 0
        %867 = vmatprep.subr.bf16.mxu0 0
        %868 = vmatpush1.bf16.xpose.msra.mxu0 0
        %869 = vmatprep.subr.bf16.mxu0 0
        %870 = vmatpush1.bf16.xpose.msra.mxu0 0
        %871 = vmatprep.subr.bf16.mxu0 0
        %872 = vmatpush1.bf16.xpose.msra.mxu0 0
        %873 = vmatprep.subr.bf16.mxu0 0
        %874 = vmatpush1.bf16.xpose.msra.mxu0 0
        %875 = vmatprep.subr.bf16.mxu0 0
        %876 = vmatpush1.bf16.xpose.msra.mxu0 0
        %877 = vmatprep.subr.bf16.mxu0 0
        %878 = vmatpush1.bf16.xpose.msra.mxu0 0
        %879 = vmatprep.subr.bf16.mxu0 0
        %880 = vmatpush1.bf16.xpose.msra.mxu0 0
        %881 = vmatprep.subr.bf16.mxu0 0
        %882 = vmatpush1.bf16.xpose.msra.mxu0 0
        %883 = vmatprep.subr.bf16.mxu0 0
        %884 = vmatpush1.bf16.xpose.msra.mxu0 0
        %885 = vmatprep.subr.bf16.mxu0 0
        %886 = vmatpush1.bf16.xpose.msra.mxu0 0
        %887 = vmatprep.subr.bf16.mxu0 0
        %888 = vmatpush1.bf16.xpose.msra.mxu0 0
        %889 = vmatprep.subr.bf16.mxu0 0
        %890 = vmatpush1.bf16.xpose.msra.mxu0 0
        %891 = vmatprep.subr.bf16.mxu0 0
        %892 = vmatpush1.bf16.xpose.msra.mxu0 0
        %893 = vmatprep.mubr.bf16.mxu0 0
        %894 = vmatmul.mubr.bf16.gmra.mrb[0].mxu0 %v856
        %v895 = vpop.f32.mrb[0].mxu0
        %v896 = vadd.f32 0.0, %v895
        %v897 = vpop.f32.mrb[0].mxu0
        %v898 = vpop.f32.mrb[0].mxu0
        %v899 = vpop.f32.mrb[0].mxu0
        %900 = vdwg.mxu0
        %vm901 = vcmask 130048
        %v902 = vsel %vm901, %v896, -inf
        %903 = vmax.xlane.f32.xlu0 %v902
        %v904 = vpop.xlane.xlu0 %903
        %v905 = vsub.f32 %v896, %v904
        %v906 = vmul.f32 %v905, 1.442695
        %v907 = vpow.pop %v906
        %v908 = vsel %vm901, %v907, 0.0
        %909 = vadd.xlane.f32.xlu0 %v908
        %v910 = vpop.xlane.xlu0 %909
        %v911 = vpack.c.bf16 %v907, %v907
        %913 = vrot.lane.b32.xlu0 %v853, 96
        %v914 = vpop.permute.xlu0 %913
        %v917 = vsel %vm901, %v911, 0
        %919 = vmatprep.subr.bf16.mxu0 0
        %920 = vmatpush1.bf16.msra.mxu0 %v914
        %921 = vmatprep.subr.bf16.mxu0 0
        %922 = vmatpush1.bf16.msra.mxu0 0
        %923 = vmatprep.subr.bf16.mxu0 0
        %924 = vmatpush1.bf16.msra.mxu0 0
        %925 = vmatprep.subr.bf16.mxu0 0
        %926 = vmatpush1.bf16.msra.mxu0 0
        %927 = vmatprep.subr.bf16.mxu0 0
        %928 = vmatpush1.bf16.msra.mxu0 0
        %929 = vmatprep.subr.bf16.mxu0 0
        %930 = vmatpush1.bf16.msra.mxu0 0
        %931 = vmatprep.subr.bf16.mxu0 0
        %932 = vmatpush1.bf16.msra.mxu0 0
        %933 = vmatprep.subr.bf16.mxu0 0
        %934 = vmatpush1.bf16.msra.mxu0 0
        %935 = vmatprep.subr.bf16.mxu0 0
        %936 = vmatpush1.bf16.msra.mxu0 0
        %937 = vmatprep.subr.bf16.mxu0 0
        %938 = vmatpush1.bf16.msra.mxu0 0
        %939 = vmatprep.subr.bf16.mxu0 0
        %940 = vmatpush1.bf16.msra.mxu0 0
        %941 = vmatprep.subr.bf16.mxu0 0
        %942 = vmatpush1.bf16.msra.mxu0 0
        %943 = vmatprep.subr.bf16.mxu0 0
        %944 = vmatpush1.bf16.msra.mxu0 0
        %945 = vmatprep.subr.bf16.mxu0 0
        %946 = vmatpush1.bf16.msra.mxu0 0
        %947 = vmatprep.subr.bf16.mxu0 0
        %948 = vmatpush1.bf16.msra.mxu0 0
        %949 = vmatprep.subr.bf16.mxu0 0
        %950 = vmatpush1.bf16.msra.mxu0 0
        %951 = vmatprep.mubr.bf16.mxu0 0
        %952 = vmatmul.mubr.bf16.gmra.mrb[0].mxu0 %v917
        %v953 = vpop.f32.mrb[0].mxu0
        %v954 = vadd.f32 0.0, %v953
        %v955 = vpop.f32.mrb[0].mxu0
        %v956 = vpop.f32.mrb[0].mxu0
        %v957 = vpop.f32.mrb[0].mxu0
        %958 = vdwg.mxu0
        %v959 = vrcp.pop %v910
        %v960 = vmul.f32 %v954, %v959
        %962 = vrot.lane.b32.xlu0 %v852, 120
        %v963 = vpop.permute.xlu0 %962
        %964 = vrot.lane.b32.xlu0 %v853, 120
        %v965 = vpop.permute.xlu0 %964
        %v967 = vsel %vm854, %v963, 0
        %v970 = vsel %vm854, %v965, 0
        %972 = vmatprep.subr.bf16.mxu0 0
        %973 = vmatpush1.bf16.xpose.msra.mxu0 %v970
        %974 = vmatprep.subr.bf16.mxu0 0
        %975 = vmatpush1.bf16.xpose.msra.mxu0 0
        %976 = vmatprep.subr.bf16.mxu0 0
        %977 = vmatpush1.bf16.xpose.msra.mxu0 0
        %978 = vmatprep.subr.bf16.mxu0 0
        %979 = vmatpush1.bf16.xpose.msra.mxu0 0
        %980 = vmatprep.subr.bf16.mxu0 0
        %981 = vmatpush1.bf16.xpose.msra.mxu0 0
        %982 = vmatprep.subr.bf16.mxu0 0
        %983 = vmatpush1.bf16.xpose.msra.mxu0 0
        %984 = vmatprep.subr.bf16.mxu0 0
        %985 = vmatpush1.bf16.xpose.msra.mxu0 0
        %986 = vmatprep.subr.bf16.mxu0 0
        %987 = vmatpush1.bf16.xpose.msra.mxu0 0
        %988 = vmatprep.subr.bf16.mxu0 0
        %989 = vmatpush1.bf16.xpose.msra.mxu0 0
        %990 = vmatprep.subr.bf16.mxu0 0
        %991 = vmatpush1.bf16.xpose.msra.mxu0 0
        %992 = vmatprep.subr.bf16.mxu0 0
        %993 = vmatpush1.bf16.xpose.msra.mxu0 0
        %994 = vmatprep.subr.bf16.mxu0 0
        %995 = vmatpush1.bf16.xpose.msra.mxu0 0
        %996 = vmatprep.subr.bf16.mxu0 0
        %997 = vmatpush1.bf16.xpose.msra.mxu0 0
        %998 = vmatprep.subr.bf16.mxu0 0
        %999 = vmatpush1.bf16.xpose.msra.mxu0 0
        %1000 = vmatprep.subr.bf16.mxu0 0
        %1001 = vmatpush1.bf16.xpose.msra.mxu0 0
        %1002 = vmatprep.subr.bf16.mxu0 0
        %1003 = vmatpush1.bf16.xpose.msra.mxu0 0
        %1004 = vmatprep.mubr.bf16.mxu0 0
        %1005 = vmatmul.mubr.bf16.gmra.mrb[0].mxu0 %v967
        %v1006 = vpop.f32.mrb[0].mxu0
        %v1007 = vadd.f32 0.0, %v1006
        %v1008 = vpop.f32.mrb[0].mxu0
        %v1009 = vpop.f32.mrb[0].mxu0
        %v1010 = vpop.f32.mrb[0].mxu0
        %1011 = vdwg.mxu0
        %v1012 = vsel %vm901, %v1007, -inf
        %1013 = vmax.xlane.f32.xlu0 %v1012
        %v1014 = vpop.xlane.xlu0 %1013
        %v1015 = vsub.f32 %v1007, %v1014
        %v1016 = vmul.f32 %v1015, 1.442695
        %v1017 = vpow.pop %v1016
        %v1018 = vsel %vm901, %v1017, 0.0
        %1019 = vadd.xlane.f32.xlu0 %v1018
        %v1020 = vpop.xlane.xlu0 %1019
        %v1021 = vpack.c.bf16 %v1017, %v1017
        %1022 = vrot.lane.b32.xlu0 %v853, 88
        %v1023 = vpop.permute.xlu0 %1022
        %v1026 = vsel %vm901, %v1021, 0
        %1028 = vmatprep.subr.bf16.mxu0 0
        %1029 = vmatpush1.bf16.msra.mxu0 %v1023
        %1030 = vmatprep.subr.bf16.mxu0 0
        %1031 = vmatpush1.bf16.msra.mxu0 0
        %1032 = vmatprep.subr.bf16.mxu0 0
        %1033 = vmatpush1.bf16.msra.mxu0 0
        %1034 = vmatprep.subr.bf16.mxu0 0
        %1035 = vmatpush1.bf16.msra.mxu0 0
        %1036 = vmatprep.subr.bf16.mxu0 0
        %1037 = vmatpush1.bf16.msra.mxu0 0
        %1038 = vmatprep.subr.bf16.mxu0 0
        %1039 = vmatpush1.bf16.msra.mxu0 0
        %1040 = vmatprep.subr.bf16.mxu0 0
        %1041 = vmatpush1.bf16.msra.mxu0 0
        %1042 = vmatprep.subr.bf16.mxu0 0
        %1043 = vmatpush1.bf16.msra.mxu0 0
        %1044 = vmatprep.subr.bf16.mxu0 0
        %1045 = vmatpush1.bf16.msra.mxu0 0
        %1046 = vmatprep.subr.bf16.mxu0 0
        %1047 = vmatpush1.bf16.msra.mxu0 0
        %1048 = vmatprep.subr.bf16.mxu0 0
        %1049 = vmatpush1.bf16.msra.mxu0 0
        %1050 = vmatprep.subr.bf16.mxu0 0
        %1051 = vmatpush1.bf16.msra.mxu0 0
        %1052 = vmatprep.subr.bf16.mxu0 0
        %1053 = vmatpush1.bf16.msra.mxu0 0
        %1054 = vmatprep.subr.bf16.mxu0 0
        %1055 = vmatpush1.bf16.msra.mxu0 0
        %1056 = vmatprep.subr.bf16.mxu0 0
        %1057 = vmatpush1.bf16.msra.mxu0 0
        %1058 = vmatprep.subr.bf16.mxu0 0
        %1059 = vmatpush1.bf16.msra.mxu0 0
        %1060 = vmatprep.mubr.bf16.mxu0 0
        %1061 = vmatmul.mubr.bf16.gmra.mrb[0].mxu0 %v1026
        %v1062 = vpop.f32.mrb[0].mxu0
        %v1063 = vadd.f32 0.0, %v1062
        %v1064 = vpop.f32.mrb[0].mxu0
        %v1065 = vpop.f32.mrb[0].mxu0
        %v1066 = vpop.f32.mrb[0].mxu0
        %1067 = vdwg.mxu0
        %v1068 = vrcp.pop %v1020
        %v1069 = vmul.f32 %v1063, %v1068
        %1070 = vrot.lane.b32.xlu0 %v852, 112
        %v1071 = vpop.permute.xlu0 %1070
        %1072 = vrot.lane.b32.xlu0 %v853, 112
        %v1073 = vpop.permute.xlu0 %1072
        %v1075 = vsel %vm854, %v1071, 0
        %v1078 = vsel %vm854, %v1073, 0
        %1080 = vmatprep.subr.bf16.mxu0 0
        %1081 = vmatpush1.bf16.xpose.msra.mxu0 %v1078
        %1082 = vmatprep.subr.bf16.mxu0 0
        %1083 = vmatpush1.bf16.xpose.msra.mxu0 0
        %1084 = vmatprep.subr.bf16.mxu0 0
        %1085 = vmatpush1.bf16.xpose.msra.mxu0 0
        %1086 = vmatprep.subr.bf16.mxu0 0
        %1087 = vmatpush1.bf16.xpose.msra.mxu0 0
        %1088 = vmatprep.subr.bf16.mxu0 0
        %1089 = vmatpush1.bf16.xpose.msra.mxu0 0
        %1090 = vmatprep.subr.bf16.mxu0 0
        %1091 = vmatpush1.bf16.xpose.msra.mxu0 0
        %1092 = vmatprep.subr.bf16.mxu0 0
        %1093 = vmatpush1.bf16.xpose.msra.mxu0 0
        %1094 = vmatprep.subr.bf16.mxu0 0
        %1095 = vmatpush1.bf16.xpose.msra.mxu0 0
        %1096 = vmatprep.subr.bf16.mxu0 0
        %1097 = vmatpush1.bf16.xpose.msra.mxu0 0
        %1098 = vmatprep.subr.bf16.mxu0 0
        %1099 = vmatpush1.bf16.xpose.msra.mxu0 0
        %1100 = vmatprep.subr.bf16.mxu0 0
        %1101 = vmatpush1.bf16.xpose.msra.mxu0 0
        %1102 = vmatprep.subr.bf16.mxu0 0
        %1103 = vmatpush1.bf16.xpose.msra.mxu0 0
        %1104 = vmatprep.subr.bf16.mxu0 0
        %1105 = vmatpush1.bf16.xpose.msra.mxu0 0
        %1106 = vmatprep.subr.bf16.mxu0 0
        %1107 = vmatpush1.bf16.xpose.msra.mxu0 0
        %1108 = vmatprep.subr.bf16.mxu0 0
        %1109 = vmatpush1.bf16.xpose.msra.mxu0 0
        %1110 = vmatprep.subr.bf16.mxu0 0
        %1111 = vmatpush1.bf16.xpose.msra.mxu0 0
        %1112 = vmatprep.mubr.bf16.mxu0 0
        %1113 = vmatmul.mubr.bf16.gmra.mrb[0].mxu0 %v1075
        %v1114 = vpop.f32.mrb[0].mxu0
        %v1115 = vadd.f32 0.0, %v1114
        %v1116 = vpop.f32.mrb[0].mxu0
        %v1117 = vpop.f32.mrb[0].mxu0
        %v1118 = vpop.f32.mrb[0].mxu0
        %1119 = vdwg.mxu0
        %v1120 = vsel %vm901, %v1115, -inf
        %1121 = vmax.xlane.f32.xlu0 %v1120
        %v1122 = vpop.xlane.xlu0 %1121
        %v1123 = vsub.f32 %v1115, %v1122
        %v1124 = vmul.f32 %v1123, 1.442695
        %v1125 = vpow.pop %v1124
        %v1126 = vsel %vm901, %v1125, 0.0
        %1127 = vadd.xlane.f32.xlu0 %v1126
        %v1128 = vpop.xlane.xlu0 %1127
        %v1129 = vpack.c.bf16 %v1125, %v1125
        %1130 = vrot.lane.b32.xlu0 %v853, 80
        %v1131 = vpop.permute.xlu0 %1130
        %v1134 = vsel %vm901, %v1129, 0
        %1136 = vmatprep.subr.bf16.mxu0 0
        %1137 = vmatpush1.bf16.msra.mxu0 %v1131
        %1138 = vmatprep.subr.bf16.mxu0 0
        %1139 = vmatpush1.bf16.msra.mxu0 0
        %1140 = vmatprep.subr.bf16.mxu0 0
        %1141 = vmatpush1.bf16.msra.mxu0 0
        %1142 = vmatprep.subr.bf16.mxu0 0
        %1143 = vmatpush1.bf16.msra.mxu0 0
        %1144 = vmatprep.subr.bf16.mxu0 0
        %1145 = vmatpush1.bf16.msra.mxu0 0
        %1146 = vmatprep.subr.bf16.mxu0 0
        %1147 = vmatpush1.bf16.msra.mxu0 0
        %1148 = vmatprep.subr.bf16.mxu0 0
        %1149 = vmatpush1.bf16.msra.mxu0 0
        %1150 = vmatprep.subr.bf16.mxu0 0
        %1151 = vmatpush1.bf16.msra.mxu0 0
        %1152 = vmatprep.subr.bf16.mxu0 0
        %1153 = vmatpush1.bf16.msra.mxu0 0
        %1154 = vmatprep.subr.bf16.mxu0 0
        %1155 = vmatpush1.bf16.msra.mxu0 0
        %1156 = vmatprep.subr.bf16.mxu0 0
        %1157 = vmatpush1.bf16.msra.mxu0 0
        %1158 = vmatprep.subr.bf16.mxu0 0
        %1159 = vmatpush1.bf16.msra.mxu0 0
        %1160 = vmatprep.subr.bf16.mxu0 0
        %1161 = vmatpush1.bf16.msra.mxu0 0
        %1162 = vmatprep.subr.bf16.mxu0 0
        %1163 = vmatpush1.bf16.msra.mxu0 0
        %1164 = vmatprep.subr.bf16.mxu0 0
        %1165 = vmatpush1.bf16.msra.mxu0 0
        %1166 = vmatprep.subr.bf16.mxu0 0
        %1167 = vmatpush1.bf16.msra.mxu0 0
        %1168 = vmatprep.mubr.bf16.mxu0 0
        %1169 = vmatmul.mubr.bf16.gmra.mrb[0].mxu0 %v1134
        %v1170 = vpop.f32.mrb[0].mxu0
        %v1171 = vadd.f32 0.0, %v1170
        %v1172 = vpop.f32.mrb[0].mxu0
        %v1173 = vpop.f32.mrb[0].mxu0
        %v1174 = vpop.f32.mrb[0].mxu0
        %1175 = vdwg.mxu0
        %v1176 = vrcp.pop %v1128
        %v1177 = vmul.f32 %v1171, %v1176
        %1178 = vrot.lane.b32.xlu0 %v852, 104
        %v1179 = vpop.permute.xlu0 %1178
        %1180 = vrot.lane.b32.xlu0 %v853, 104
        %v1181 = vpop.permute.xlu0 %1180
        %v1183 = vsel %vm854, %v1179, 0
        %v1186 = vsel %vm854, %v1181, 0
        %1188 = vmatprep.subr.bf16.mxu0 0
        %1189 = vmatpush1.bf16.xpose.msra.mxu0 %v1186
        %1190 = vmatprep.subr.bf16.mxu0 0
        %1191 = vmatpush1.bf16.xpose.msra.mxu0 0
        %1192 = vmatprep.subr.bf16.mxu0 0
        %1193 = vmatpush1.bf16.xpose.msra.mxu0 0
        %1194 = vmatprep.subr.bf16.mxu0 0
        %1195 = vmatpush1.bf16.xpose.msra.mxu0 0
        %1196 = vmatprep.subr.bf16.mxu0 0
        %1197 = vmatpush1.bf16.xpose.msra.mxu0 0
        %1198 = vmatprep.subr.bf16.mxu0 0
        %1199 = vmatpush1.bf16.xpose.msra.mxu0 0
        %1200 = vmatprep.subr.bf16.mxu0 0
        %1201 = vmatpush1.bf16.xpose.msra.mxu0 0
        %1202 = vmatprep.subr.bf16.mxu0 0
        %1203 = vmatpush1.bf16.xpose.msra.mxu0 0
        %1204 = vmatprep.subr.bf16.mxu0 0
        %1205 = vmatpush1.bf16.xpose.msra.mxu0 0
        %1206 = vmatprep.subr.bf16.mxu0 0
        %1207 = vmatpush1.bf16.xpose.msra.mxu0 0
        %1208 = vmatprep.subr.bf16.mxu0 0
        %1209 = vmatpush1.bf16.xpose.msra.mxu0 0
        %1210 = vmatprep.subr.bf16.mxu0 0
        %1211 = vmatpush1.bf16.xpose.msra.mxu0 0
        %1212 = vmatprep.subr.bf16.mxu0 0
        %1213 = vmatpush1.bf16.xpose.msra.mxu0 0
        %1214 = vmatprep.subr.bf16.mxu0 0
        %1215 = vmatpush1.bf16.xpose.msra.mxu0 0
        %1216 = vmatprep.subr.bf16.mxu0 0
        %1217 = vmatpush1.bf16.xpose.msra.mxu0 0
        %1218 = vmatprep.subr.bf16.mxu0 0
        %1219 = vmatpush1.bf16.xpose.msra.mxu0 0
        %1220 = vmatprep.mubr.bf16.mxu0 0
        %1221 = vmatmul.mubr.bf16.gmra.mrb[0].mxu0 %v1183
        %v1222 = vpop.f32.mrb[0].mxu0
        %v1223 = vadd.f32 0.0, %v1222
        %v1224 = vpop.f32.mrb[0].mxu0
        %v1225 = vpop.f32.mrb[0].mxu0
        %v1226 = vpop.f32.mrb[0].mxu0
        %1227 = vdwg.mxu0
        %v1228 = vsel %vm901, %v1223, -inf
        %1229 = vmax.xlane.f32.xlu0 %v1228
        %v1230 = vpop.xlane.xlu0 %1229
        %v1231 = vsub.f32 %v1223, %v1230
        %v1232 = vmul.f32 %v1231, 1.442695
        %v1233 = vpow.pop %v1232
        %v1234 = vsel %vm901, %v1233, 0.0
        %1235 = vadd.xlane.f32.xlu0 %v1234
        %v1236 = vpop.xlane.xlu0 %1235
        %v1237 = vpack.c.bf16 %v1233, %v1233
        %1238 = vrot.lane.b32.xlu0 %v853, 72
        %v1239 = vpop.permute.xlu0 %1238
        %v1242 = vsel %vm901, %v1237, 0
        %1244 = vmatprep.subr.bf16.mxu0 0
        %1245 = vmatpush1.bf16.msra.mxu0 %v1239
        %1246 = vmatprep.subr.bf16.mxu0 0
        %1247 = vmatpush1.bf16.msra.mxu0 0
        %1248 = vmatprep.subr.bf16.mxu0 0
        %1249 = vmatpush1.bf16.msra.mxu0 0
        %1250 = vmatprep.subr.bf16.mxu0 0
        %1251 = vmatpush1.bf16.msra.mxu0 0
        %1252 = vmatprep.subr.bf16.mxu0 0
        %1253 = vmatpush1.bf16.msra.mxu0 0
        %1254 = vmatprep.subr.bf16.mxu0 0
        %1255 = vmatpush1.bf16.msra.mxu0 0
        %1256 = vmatprep.subr.bf16.mxu0 0
        %1257 = vmatpush1.bf16.msra.mxu0 0
        %1258 = vmatprep.subr.bf16.mxu0 0
        %1259 = vmatpush1.bf16.msra.mxu0 0
        %1260 = vmatprep.subr.bf16.mxu0 0
        %1261 = vmatpush1.bf16.msra.mxu0 0
        %1262 = vmatprep.subr.bf16.mxu0 0
        %1263 = vmatpush1.bf16.msra.mxu0 0
        %1264 = vmatprep.subr.bf16.mxu0 0
        %1265 = vmatpush1.bf16.msra.mxu0 0
        %1266 = vmatprep.subr.bf16.mxu0 0
        %1267 = vmatpush1.bf16.msra.mxu0 0
        %1268 = vmatprep.subr.bf16.mxu0 0
        %1269 = vmatpush1.bf16.msra.mxu0 0
        %1270 = vmatprep.subr.bf16.mxu0 0
        %1271 = vmatpush1.bf16.msra.mxu0 0
        %1272 = vmatprep.subr.bf16.mxu0 0
        %1273 = vmatpush1.bf16.msra.mxu0 0
        %1274 = vmatprep.subr.bf16.mxu0 0
        %1275 = vmatpush1.bf16.msra.mxu0 0
        %1276 = vmatprep.mubr.bf16.mxu0 0
        %1277 = vmatmul.mubr.bf16.gmra.mrb[0].mxu0 %v1242
        %v1278 = vpop.f32.mrb[0].mxu0
        %v1279 = vadd.f32 0.0, %v1278
        %v1280 = vpop.f32.mrb[0].mxu0
        %v1281 = vpop.f32.mrb[0].mxu0
        %v1282 = vpop.f32.mrb[0].mxu0
        %1283 = vdwg.mxu0
        %v1284 = vrcp.pop %v1236
        %v1285 = vmul.f32 %v1279, %v1284
        %1287 = vrot.lane.b32.xlu0 %v1069, 8
        %v1288 = vpop.permute.xlu0 %1287
        %1291 = vrot.lane.b32.xlu0 %v1177, 16
        %v1292 = vpop.permute.xlu0 %1291
        %1295 = vrot.lane.b32.xlu0 %v1285, 24
        %v1296 = vpop.permute.xlu0 %1295
        %v1298 = vsel %vm854, %v960, %v1288
        %v1299 = vsel %vm901, %v1298, %v1292
        %vm1300 = vcmask 195584
        %v1301 = vsel %vm1300, %v1299, %v1296
        %v1302 = vpack.c.bf16 %v1301, %v1301
        %v1303 = vld [vmem:[#allocation5] sm:$0xf]
        %v1304 = vld [vmem:[#allocation5 + $0x4] sm:$0xf]
        %v1305 = vld [vmem:[#allocation5 + $0x8] sm:$0xf]
        %v1306 = vld [vmem:[#allocation5 + $0xc] sm:$0xf]
        %v1308 = vlaneseq
        %v1309 = vshrl.u32 %v1308, 7
        %v1310 = vsub.s32 0, %v1309
        %v1311 = vrot.slane %v851, %v1310
        %v1317 = vunpack.c.l.b16 %v1303
        %v1318 = vunpack.c.l.b16 %v1304
        %v1319 = vunpack.c.l.b16 %v1305
        %v1320 = vunpack.c.l.b16 %v1306
        %v1321 = vpack.c.b16 %v1318, %v1317
        %v1322 = vpack.c.b16 %v1320, %v1319
        %v1326 = vsel %vm655, %v1302, 0
        %1328 = vmatprep.subr.bf16.mxu0 0
        %1329 = vmatpush1.bf16.msra.mxu0 %v1321
        %1330 = vmatprep.subr.bf16.mxu0 0
        %1331 = vmatpush1.bf16.msra.mxu0 %v1322
        %1332 = vmatprep.subr.bf16.mxu0 0
        %1333 = vmatpush1.bf16.msra.mxu0 0
        %1334 = vmatprep.subr.bf16.mxu0 0
        %1335 = vmatpush1.bf16.msra.mxu0 0
        %1336 = vmatprep.subr.bf16.mxu0 0
        %1337 = vmatpush1.bf16.msra.mxu0 0
        %1338 = vmatprep.subr.bf16.mxu0 0
        %1339 = vmatpush1.bf16.msra.mxu0 0
        %1340 = vmatprep.subr.bf16.mxu0 0
        %1341 = vmatpush1.bf16.msra.mxu0 0
        %1342 = vmatprep.subr.bf16.mxu0 0
        %1343 = vmatpush1.bf16.msra.mxu0 0
        %1344 = vmatprep.subr.bf16.mxu0 0
        %1345 = vmatpush1.bf16.msra.mxu0 0
        %1346 = vmatprep.subr.bf16.mxu0 0
        %1347 = vmatpush1.bf16.msra.mxu0 0
        %1348 = vmatprep.subr.bf16.mxu0 0
        %1349 = vmatpush1.bf16.msra.mxu0 0
        %1350 = vmatprep.subr.bf16.mxu0 0
        %1351 = vmatpush1.bf16.msra.mxu0 0
        %1352 = vmatprep.subr.bf16.mxu0 0
        %1353 = vmatpush1.bf16.msra.mxu0 0
        %1354 = vmatprep.subr.bf16.mxu0 0
        %1355 = vmatpush1.bf16.msra.mxu0 0
        %1356 = vmatprep.subr.bf16.mxu0 0
        %1357 = vmatpush1.bf16.msra.mxu0 0
        %1358 = vmatprep.subr.bf16.mxu0 0
        %1359 = vmatpush1.bf16.msra.mxu0 0
        %1360 = vmatprep.mubr.bf16.mxu0 0
        %1361 = vmatmul.mubr.bf16.gmra.mrb[0].mxu0 %v1326
        %v1362 = vpop.f32.mrb[0].mxu0
        %v1363 = vadd.f32 %v1311, %v1362
        %v1364 = vpop.f32.mrb[0].mxu0
        %v1365 = vpop.f32.mrb[0].mxu0
        %v1366 = vpop.f32.mrb[0].mxu0
        %1367 = vdwg.mxu0
        %v1368 = vpack.c.bf16 %v1363, %v1363
        %v1370 = vsel %vm655, %v1368, 0
        %1372 = vmatprep.subr.bf16.mxu0 0
        %1373 = vmatpush1.bf16.msra.mxu0 %v803
        %1374 = vmatprep.subr.bf16.mxu0 0
        %1375 = vmatpush1.bf16.msra.mxu0 %v804
        %1376 = vmatprep.subr.bf16.mxu0 0
        %1377 = vmatpush1.bf16.msra.mxu0 0
        %1378 = vmatprep.subr.bf16.mxu0 0
        %1379 = vmatpush1.bf16.msra.mxu0 0
        %1380 = vmatprep.subr.bf16.mxu0 0
        %1381 = vmatpush1.bf16.msra.mxu0 0
        %1382 = vmatprep.subr.bf16.mxu0 0
        %1383 = vmatpush1.bf16.msra.mxu0 0
        %1384 = vmatprep.subr.bf16.mxu0 0
        %1385 = vmatpush1.bf16.msra.mxu0 0
        %1386 = vmatprep.subr.bf16.mxu0 0
        %1387 = vmatpush1.bf16.msra.mxu0 0
        %1388 = vmatprep.subr.bf16.mxu0 0
        %1389 = vmatpush1.bf16.msra.mxu0 0
        %1390 = vmatprep.subr.bf16.mxu0 0
        %1391 = vmatpush1.bf16.msra.mxu0 0
        %1392 = vmatprep.subr.bf16.mxu0 0
        %1393 = vmatpush1.bf16.msra.mxu0 0
        %1394 = vmatprep.subr.bf16.mxu0 0
        %1395 = vmatpush1.bf16.msra.mxu0 0
        %1396 = vmatprep.subr.bf16.mxu0 0
        %1397 = vmatpush1.bf16.msra.mxu0 0
        %1398 = vmatprep.subr.bf16.mxu0 0
        %1399 = vmatpush1.bf16.msra.mxu0 0
        %1400 = vmatprep.subr.bf16.mxu0 0
        %1401 = vmatpush1.bf16.msra.mxu0 0
        %1402 = vmatprep.subr.bf16.mxu0 0
        %1403 = vmatpush1.bf16.msra.mxu0 0
        %1404 = vmatprep.mubr.bf16.mxu0 0
        %1405 = vmatmul.mubr.bf16.gmra.mrb[0].mxu0 %v1370
        %v1406 = vpop.f32.mrb[0].mxu0
        %v1407 = vadd.f32 0.0, %v1406
        %v1408 = vpop.f32.mrb[0].mxu0
        %v1409 = vpop.f32.mrb[0].mxu0
        %v1410 = vpop.f32.mrb[0].mxu0
        %1411 = vdwg.mxu0
        %v1412 = vpack.c.bf16 %v787, %v787
        %v1413 = vpack.c.bf16 %v1407, %v1407
        %v1415 = vsel %vm854, %v1412, 0
        %v1418 = vsel %vm854, %v1413, 0
        %1420 = vmatprep.subr.bf16.mxu0 0
        %1421 = vmatpush1.bf16.xpose.msra.mxu0 %v1418
        %1422 = vmatprep.subr.bf16.mxu0 0
        %1423 = vmatpush1.bf16.xpose.msra.mxu0 0
        %1424 = vmatprep.subr.bf16.mxu0 0
        %1425 = vmatpush1.bf16.xpose.msra.mxu0 0
        %1426 = vmatprep.subr.bf16.mxu0 0
        %1427 = vmatpush1.bf16.xpose.msra.mxu0 0
        %1428 = vmatprep.subr.bf16.mxu0 0
        %1429 = vmatpush1.bf16.xpose.msra.mxu0 0
        %1430 = vmatprep.subr.bf16.mxu0 0
        %1431 = vmatpush1.bf16.xpose.msra.mxu0 0
        %1432 = vmatprep.subr.bf16.mxu0 0
        %1433 = vmatpush1.bf16.xpose.msra.mxu0 0
        %1434 = vmatprep.subr.bf16.mxu0 0
        %1435 = vmatpush1.bf16.xpose.msra.mxu0 0
        %1436 = vmatprep.subr.bf16.mxu0 0
        %1437 = vmatpush1.bf16.xpose.msra.mxu0 0
        %1438 = vmatprep.subr.bf16.mxu0 0
        %1439 = vmatpush1.bf16.xpose.msra.mxu0 0
        %1440 = vmatprep.subr.bf16.mxu0 0
        %1441 = vmatpush1.bf16.xpose.msra.mxu0 0
        %1442 = vmatprep.subr.bf16.mxu0 0
        %1443 = vmatpush1.bf16.xpose.msra.mxu0 0
        %1444 = vmatprep.subr.bf16.mxu0 0
        %1445 = vmatpush1.bf16.xpose.msra.mxu0 0
        %1446 = vmatprep.subr.bf16.mxu0 0
        %1447 = vmatpush1.bf16.xpose.msra.mxu0 0
        %1448 = vmatprep.subr.bf16.mxu0 0
        %1449 = vmatpush1.bf16.xpose.msra.mxu0 0
        %1450 = vmatprep.subr.bf16.mxu0 0
        %1451 = vmatpush1.bf16.xpose.msra.mxu0 0
        %1452 = vmatprep.mubr.bf16.mxu0 0
        %1453 = vmatmul.mubr.bf16.gmra.mrb[0].mxu0 %v1415
        %v1454 = vpop.f32.mrb[0].mxu0
        %v1455 = vadd.f32 0.0, %v1454
        %v1456 = vpop.f32.mrb[0].mxu0
        %v1457 = vpop.f32.mrb[0].mxu0
        %v1458 = vpop.f32.mrb[0].mxu0
        %1459 = vdwg.mxu0
        %v1460 = vsel %vm854, %v1455, -inf
        %1461 = vmax.xlane.f32.xlu0 %v1460
        %v1462 = vpop.xlane.xlu0 %1461
        %v1463 = vsub.f32 %v1455, %v1462
        %v1464 = vmul.f32 %v1463, 1.442695
        %v1465 = vpow.pop %v1464
        %v1466 = vsel %vm854, %v1465, 0.0
        %1467 = vadd.xlane.f32.xlu0 %v1466
        %v1468 = vpop.xlane.xlu0 %1467
        %v1469 = vpack.c.bf16 %v1465, %v1465
        %1471 = vrot.lane.b32.xlu0 %v1413, 96
        %v1472 = vpop.permute.xlu0 %1471
        %v1474 = vsel %vm854, %v1469, 0
        %vm1476 = vcmask 1043456
        %v1478 = vsel %vm1476, %v1472, 0
        %1480 = vmatprep.subr.bf16.mxu0 0
        %1481 = vmatpush1.bf16.msra.mxu0 %v1478
        %1482 = vmatprep.subr.bf16.mxu0 0
        %1483 = vmatpush1.bf16.msra.mxu0 0
        %1484 = vmatprep.subr.bf16.mxu0 0
        %1485 = vmatpush1.bf16.msra.mxu0 0
        %1486 = vmatprep.subr.bf16.mxu0 0
        %1487 = vmatpush1.bf16.msra.mxu0 0
        %1488 = vmatprep.subr.bf16.mxu0 0
        %1489 = vmatpush1.bf16.msra.mxu0 0
        %1490 = vmatprep.subr.bf16.mxu0 0
        %1491 = vmatpush1.bf16.msra.mxu0 0
        %1492 = vmatprep.subr.bf16.mxu0 0
        %1493 = vmatpush1.bf16.msra.mxu0 0
        %1494 = vmatprep.subr.bf16.mxu0 0
        %1495 = vmatpush1.bf16.msra.mxu0 0
        %1496 = vmatprep.subr.bf16.mxu0 0
        %1497 = vmatpush1.bf16.msra.mxu0 0
        %1498 = vmatprep.subr.bf16.mxu0 0
        %1499 = vmatpush1.bf16.msra.mxu0 0
        %1500 = vmatprep.subr.bf16.mxu0 0
        %1501 = vmatpush1.bf16.msra.mxu0 0
        %1502 = vmatprep.subr.bf16.mxu0 0
        %1503 = vmatpush1.bf16.msra.mxu0 0
        %1504 = vmatprep.subr.bf16.mxu0 0
        %1505 = vmatpush1.bf16.msra.mxu0 0
        %1506 = vmatprep.subr.bf16.mxu0 0
        %1507 = vmatpush1.bf16.msra.mxu0 0
        %1508 = vmatprep.subr.bf16.mxu0 0
        %1509 = vmatpush1.bf16.msra.mxu0 0
        %1510 = vmatprep.subr.bf16.mxu0 0
        %1511 = vmatpush1.bf16.msra.mxu0 0
        %1512 = vmatprep.mubr.bf16.mxu0 0
        %1513 = vmatmul.mubr.bf16.gmra.mrb[0].mxu0 %v1474
        %v1514 = vpop.f32.mrb[0].mxu0
        %v1515 = vadd.f32 0.0, %v1514
        %v1516 = vpop.f32.mrb[0].mxu0
        %v1517 = vpop.f32.mrb[0].mxu0
        %v1518 = vpop.f32.mrb[0].mxu0
        %1519 = vdwg.mxu0
        %v1520 = vrcp.pop %v1468
        %v1521 = vmul.f32 %v1515, %v1520
        %1523 = vrot.lane.b32.xlu0 %v1412, 120
        %v1524 = vpop.permute.xlu0 %1523
        %1525 = vrot.lane.b32.xlu0 %v1413, 120
        %v1526 = vpop.permute.xlu0 %1525
        %v1528 = vsel %vm854, %v1524, 0
        %v1531 = vsel %vm854, %v1526, 0
        %1533 = vmatprep.subr.bf16.mxu0 0
        %1534 = vmatpush1.bf16.xpose.msra.mxu0 %v1531
        %1535 = vmatprep.subr.bf16.mxu0 0
        %1536 = vmatpush1.bf16.xpose.msra.mxu0 0
        %1537 = vmatprep.subr.bf16.mxu0 0
        %1538 = vmatpush1.bf16.xpose.msra.mxu0 0
        %1539 = vmatprep.subr.bf16.mxu0 0
        %1540 = vmatpush1.bf16.xpose.msra.mxu0 0
        %1541 = vmatprep.subr.bf16.mxu0 0
        %1542 = vmatpush1.bf16.xpose.msra.mxu0 0
        %1543 = vmatprep.subr.bf16.mxu0 0
        %1544 = vmatpush1.bf16.xpose.msra.mxu0 0
        %1545 = vmatprep.subr.bf16.mxu0 0
        %1546 = vmatpush1.bf16.xpose.msra.mxu0 0
        %1547 = vmatprep.subr.bf16.mxu0 0
        %1548 = vmatpush1.bf16.xpose.msra.mxu0 0
        %1549 = vmatprep.subr.bf16.mxu0 0
        %1550 = vmatpush1.bf16.xpose.msra.mxu0 0
        %1551 = vmatprep.subr.bf16.mxu0 0
        %1552 = vmatpush1.bf16.xpose.msra.mxu0 0
        %1553 = vmatprep.subr.bf16.mxu0 0
        %1554 = vmatpush1.bf16.xpose.msra.mxu0 0
        %1555 = vmatprep.subr.bf16.mxu0 0
        %1556 = vmatpush1.bf16.xpose.msra.mxu0 0
        %1557 = vmatprep.subr.bf16.mxu0 0
        %1558 = vmatpush1.bf16.xpose.msra.mxu0 0
        %1559 = vmatprep.subr.bf16.mxu0 0
        %1560 = vmatpush1.bf16.xpose.msra.mxu0 0
        %1561 = vmatprep.subr.bf16.mxu0 0
        %1562 = vmatpush1.bf16.xpose.msra.mxu0 0
        %1563 = vmatprep.subr.bf16.mxu0 0
        %1564 = vmatpush1.bf16.xpose.msra.mxu0 0
        %1565 = vmatprep.mubr.bf16.mxu0 0
        %1566 = vmatmul.mubr.bf16.gmra.mrb[0].mxu0 %v1528
        %v1567 = vpop.f32.mrb[0].mxu0
        %v1568 = vadd.f32 0.0, %v1567
        %v1569 = vpop.f32.mrb[0].mxu0
        %v1570 = vpop.f32.mrb[0].mxu0
        %v1571 = vpop.f32.mrb[0].mxu0
        %1572 = vdwg.mxu0
        %v1573 = vsel %vm854, %v1568, -inf
        %1574 = vmax.xlane.f32.xlu0 %v1573
        %v1575 = vpop.xlane.xlu0 %1574
        %v1576 = vsub.f32 %v1568, %v1575
        %v1577 = vmul.f32 %v1576, 1.442695
        %v1578 = vpow.pop %v1577
        %v1579 = vsel %vm854, %v1578, 0.0
        %1580 = vadd.xlane.f32.xlu0 %v1579
        %v1581 = vpop.xlane.xlu0 %1580
        %v1582 = vpack.c.bf16 %v1578, %v1578
        %1583 = vrot.lane.b32.xlu0 %v1413, 88
        %v1584 = vpop.permute.xlu0 %1583
        %v1586 = vsel %vm854, %v1582, 0
        %v1589 = vsel %vm1476, %v1584, 0
        %1591 = vmatprep.subr.bf16.mxu0 0
        %1592 = vmatpush1.bf16.msra.mxu0 %v1589
        %1593 = vmatprep.subr.bf16.mxu0 0
        %1594 = vmatpush1.bf16.msra.mxu0 0
        %1595 = vmatprep.subr.bf16.mxu0 0
        %1596 = vmatpush1.bf16.msra.mxu0 0
        %1597 = vmatprep.subr.bf16.mxu0 0
        %1598 = vmatpush1.bf16.msra.mxu0 0
        %1599 = vmatprep.subr.bf16.mxu0 0
        %1600 = vmatpush1.bf16.msra.mxu0 0
        %1601 = vmatprep.subr.bf16.mxu0 0
        %1602 = vmatpush1.bf16.msra.mxu0 0
        %1603 = vmatprep.subr.bf16.mxu0 0
        %1604 = vmatpush1.bf16.msra.mxu0 0
        %1605 = vmatprep.subr.bf16.mxu0 0
        %1606 = vmatpush1.bf16.msra.mxu0 0
        %1607 = vmatprep.subr.bf16.mxu0 0
        %1608 = vmatpush1.bf16.msra.mxu0 0
        %1609 = vmatprep.subr.bf16.mxu0 0
        %1610 = vmatpush1.bf16.msra.mxu0 0
        %1611 = vmatprep.subr.bf16.mxu0 0
        %1612 = vmatpush1.bf16.msra.mxu0 0
        %1613 = vmatprep.subr.bf16.mxu0 0
        %1614 = vmatpush1.bf16.msra.mxu0 0
        %1615 = vmatprep.subr.bf16.mxu0 0
        %1616 = vmatpush1.bf16.msra.mxu0 0
        %1617 = vmatprep.subr.bf16.mxu0 0
        %1618 = vmatpush1.bf16.msra.mxu0 0
        %1619 = vmatprep.subr.bf16.mxu0 0
        %1620 = vmatpush1.bf16.msra.mxu0 0
        %1621 = vmatprep.subr.bf16.mxu0 0
        %1622 = vmatpush1.bf16.msra.mxu0 0
        %1623 = vmatprep.mubr.bf16.mxu0 0
        %1624 = vmatmul.mubr.bf16.gmra.mrb[0].mxu0 %v1586
        %v1625 = vpop.f32.mrb[0].mxu0
        %v1626 = vadd.f32 0.0, %v1625
        %v1627 = vpop.f32.mrb[0].mxu0
        %v1628 = vpop.f32.mrb[0].mxu0
        %v1629 = vpop.f32.mrb[0].mxu0
        %1630 = vdwg.mxu0
        %v1631 = vrcp.pop %v1581
        %v1632 = vmul.f32 %v1626, %v1631
        %1633 = vrot.lane.b32.xlu0 %v1412, 112
        %v1634 = vpop.permute.xlu0 %1633
        %1635 = vrot.lane.b32.xlu0 %v1413, 112
        %v1636 = vpop.permute.xlu0 %1635
        %v1638 = vsel %vm854, %v1634, 0
        %v1641 = vsel %vm854, %v1636, 0
        %1643 = vmatprep.subr.bf16.mxu0 0
        %1644 = vmatpush1.bf16.xpose.msra.mxu0 %v1641
        %1645 = vmatprep.subr.bf16.mxu0 0
        %1646 = vmatpush1.bf16.xpose.msra.mxu0 0
        %1647 = vmatprep.subr.bf16.mxu0 0
        %1648 = vmatpush1.bf16.xpose.msra.mxu0 0
        %1649 = vmatprep.subr.bf16.mxu0 0
        %1650 = vmatpush1.bf16.xpose.msra.mxu0 0
        %1651 = vmatprep.subr.bf16.mxu0 0
        %1652 = vmatpush1.bf16.xpose.msra.mxu0 0
        %1653 = vmatprep.subr.bf16.mxu0 0
        %1654 = vmatpush1.bf16.xpose.msra.mxu0 0
        %1655 = vmatprep.subr.bf16.mxu0 0
        %1656 = vmatpush1.bf16.xpose.msra.mxu0 0
        %1657 = vmatprep.subr.bf16.mxu0 0
        %1658 = vmatpush1.bf16.xpose.msra.mxu0 0
        %1659 = vmatprep.subr.bf16.mxu0 0
        %1660 = vmatpush1.bf16.xpose.msra.mxu0 0
        %1661 = vmatprep.subr.bf16.mxu0 0
        %1662 = vmatpush1.bf16.xpose.msra.mxu0 0
        %1663 = vmatprep.subr.bf16.mxu0 0
        %1664 = vmatpush1.bf16.xpose.msra.mxu0 0
        %1665 = vmatprep.subr.bf16.mxu0 0
        %1666 = vmatpush1.bf16.xpose.msra.mxu0 0
        %1667 = vmatprep.subr.bf16.mxu0 0
        %1668 = vmatpush1.bf16.xpose.msra.mxu0 0
        %1669 = vmatprep.subr.bf16.mxu0 0
        %1670 = vmatpush1.bf16.xpose.msra.mxu0 0
        %1671 = vmatprep.subr.bf16.mxu0 0
        %1672 = vmatpush1.bf16.xpose.msra.mxu0 0
        %1673 = vmatprep.subr.bf16.mxu0 0
        %1674 = vmatpush1.bf16.xpose.msra.mxu0 0
        %1675 = vmatprep.mubr.bf16.mxu0 0
        %1676 = vmatmul.mubr.bf16.gmra.mrb[0].mxu0 %v1638
        %v1677 = vpop.f32.mrb[0].mxu0
        %v1678 = vadd.f32 0.0, %v1677
        %v1679 = vpop.f32.mrb[0].mxu0
        %v1680 = vpop.f32.mrb[0].mxu0
        %v1681 = vpop.f32.mrb[0].mxu0
        %1682 = vdwg.mxu0
        %v1683 = vsel %vm854, %v1678, -inf
        %1684 = vmax.xlane.f32.xlu0 %v1683
        %v1685 = vpop.xlane.xlu0 %1684
        %v1686 = vsub.f32 %v1678, %v1685
        %v1687 = vmul.f32 %v1686, 1.442695
        %v1688 = vpow.pop %v1687
        %v1689 = vsel %vm854, %v1688, 0.0
        %1690 = vadd.xlane.f32.xlu0 %v1689
        %v1691 = vpop.xlane.xlu0 %1690
        %v1692 = vpack.c.bf16 %v1688, %v1688
        %1693 = vrot.lane.b32.xlu0 %v1413, 80
        %v1694 = vpop.permute.xlu0 %1693
        %v1696 = vsel %vm854, %v1692, 0
        %v1699 = vsel %vm1476, %v1694, 0
        %1701 = vmatprep.subr.bf16.mxu0 0
        %1702 = vmatpush1.bf16.msra.mxu0 %v1699
        %1703 = vmatprep.subr.bf16.mxu0 0
        %1704 = vmatpush1.bf16.msra.mxu0 0
        %1705 = vmatprep.subr.bf16.mxu0 0
        %1706 = vmatpush1.bf16.msra.mxu0 0
        %1707 = vmatprep.subr.bf16.mxu0 0
        %1708 = vmatpush1.bf16.msra.mxu0 0
        %1709 = vmatprep.subr.bf16.mxu0 0
        %1710 = vmatpush1.bf16.msra.mxu0 0
        %1711 = vmatprep.subr.bf16.mxu0 0
        %1712 = vmatpush1.bf16.msra.mxu0 0
        %1713 = vmatprep.subr.bf16.mxu0 0
        %1714 = vmatpush1.bf16.msra.mxu0 0
        %1715 = vmatprep.subr.bf16.mxu0 0
        %1716 = vmatpush1.bf16.msra.mxu0 0
        %1717 = vmatprep.subr.bf16.mxu0 0
        %1718 = vmatpush1.bf16.msra.mxu0 0
        %1719 = vmatprep.subr.bf16.mxu0 0
        %1720 = vmatpush1.bf16.msra.mxu0 0
        %1721 = vmatprep.subr.bf16.mxu0 0
        %1722 = vmatpush1.bf16.msra.mxu0 0
        %1723 = vmatprep.subr.bf16.mxu0 0
        %1724 = vmatpush1.bf16.msra.mxu0 0
        %1725 = vmatprep.subr.bf16.mxu0 0
        %1726 = vmatpush1.bf16.msra.mxu0 0
        %1727 = vmatprep.subr.bf16.mxu0 0
        %1728 = vmatpush1.bf16.msra.mxu0 0
        %1729 = vmatprep.subr.bf16.mxu0 0
        %1730 = vmatpush1.bf16.msra.mxu0 0
        %1731 = vmatprep.subr.bf16.mxu0 0
        %1732 = vmatpush1.bf16.msra.mxu0 0
        %1733 = vmatprep.mubr.bf16.mxu0 0
        %1734 = vmatmul.mubr.bf16.gmra.mrb[0].mxu0 %v1696
        %v1735 = vpop.f32.mrb[0].mxu0
        %v1736 = vadd.f32 0.0, %v1735
        %v1737 = vpop.f32.mrb[0].mxu0
        %v1738 = vpop.f32.mrb[0].mxu0
        %v1739 = vpop.f32.mrb[0].mxu0
        %1740 = vdwg.mxu0
        %v1741 = vrcp.pop %v1691
        %v1742 = vmul.f32 %v1736, %v1741
        %1743 = vrot.lane.b32.xlu0 %v1412, 104
        %v1744 = vpop.permute.xlu0 %1743
        %1745 = vrot.lane.b32.xlu0 %v1413, 104
        %v1746 = vpop.permute.xlu0 %1745
        %v1748 = vsel %vm854, %v1744, 0
        %v1751 = vsel %vm854, %v1746, 0
        %1753 = vmatprep.subr.bf16.mxu0 0
        %1754 = vmatpush1.bf16.xpose.msra.mxu0 %v1751
        %1755 = vmatprep.subr.bf16.mxu0 0
        %1756 = vmatpush1.bf16.xpose.msra.mxu0 0
        %1757 = vmatprep.subr.bf16.mxu0 0
        %1758 = vmatpush1.bf16.xpose.msra.mxu0 0
        %1759 = vmatprep.subr.bf16.mxu0 0
        %1760 = vmatpush1.bf16.xpose.msra.mxu0 0
        %1761 = vmatprep.subr.bf16.mxu0 0
        %1762 = vmatpush1.bf16.xpose.msra.mxu0 0
        %1763 = vmatprep.subr.bf16.mxu0 0
        %1764 = vmatpush1.bf16.xpose.msra.mxu0 0
        %1765 = vmatprep.subr.bf16.mxu0 0
        %1766 = vmatpush1.bf16.xpose.msra.mxu0 0
        %1767 = vmatprep.subr.bf16.mxu0 0
        %1768 = vmatpush1.bf16.xpose.msra.mxu0 0
        %1769 = vmatprep.subr.bf16.mxu0 0
        %1770 = vmatpush1.bf16.xpose.msra.mxu0 0
        %1771 = vmatprep.subr.bf16.mxu0 0
        %1772 = vmatpush1.bf16.xpose.msra.mxu0 0
        %1773 = vmatprep.subr.bf16.mxu0 0
        %1774 = vmatpush1.bf16.xpose.msra.mxu0 0
        %1775 = vmatprep.subr.bf16.mxu0 0
        %1776 = vmatpush1.bf16.xpose.msra.mxu0 0
        %1777 = vmatprep.subr.bf16.mxu0 0
        %1778 = vmatpush1.bf16.xpose.msra.mxu0 0
        %1779 = vmatprep.subr.bf16.mxu0 0
        %1780 = vmatpush1.bf16.xpose.msra.mxu0 0
        %1781 = vmatprep.subr.bf16.mxu0 0
        %1782 = vmatpush1.bf16.xpose.msra.mxu0 0
        %1783 = vmatprep.subr.bf16.mxu0 0
        %1784 = vmatpush1.bf16.xpose.msra.mxu0 0
        %1785 = vmatprep.mubr.bf16.mxu0 0
        %1786 = vmatmul.mubr.bf16.gmra.mrb[0].mxu0 %v1748
        %v1787 = vpop.f32.mrb[0].mxu0
        %v1788 = vadd.f32 0.0, %v1787
        %v1789 = vpop.f32.mrb[0].mxu0
        %v1790 = vpop.f32.mrb[0].mxu0
        %v1791 = vpop.f32.mrb[0].mxu0
        %1792 = vdwg.mxu0
        %v1793 = vsel %vm854, %v1788, -inf
        %1794 = vmax.xlane.f32.xlu0 %v1793
        %v1795 = vpop.xlane.xlu0 %1794
        %v1796 = vsub.f32 %v1788, %v1795
        %v1797 = vmul.f32 %v1796, 1.442695
        %v1798 = vpow.pop %v1797
        %v1799 = vsel %vm854, %v1798, 0.0
        %1800 = vadd.xlane.f32.xlu0 %v1799
        %v1801 = vpop.xlane.xlu0 %1800
        %v1802 = vpack.c.bf16 %v1798, %v1798
        %1803 = vrot.lane.b32.xlu0 %v1413, 72
        %v1804 = vpop.permute.xlu0 %1803
        %v1806 = vsel %vm854, %v1802, 0
        %v1809 = vsel %vm1476, %v1804, 0
        %1811 = vmatprep.subr.bf16.mxu0 0
        %1812 = vmatpush1.bf16.msra.mxu0 %v1809
        %1813 = vmatprep.subr.bf16.mxu0 0
        %1814 = vmatpush1.bf16.msra.mxu0 0
        %1815 = vmatprep.subr.bf16.mxu0 0
        %1816 = vmatpush1.bf16.msra.mxu0 0
        %1817 = vmatprep.subr.bf16.mxu0 0
        %1818 = vmatpush1.bf16.msra.mxu0 0
        %1819 = vmatprep.subr.bf16.mxu0 0
        %1820 = vmatpush1.bf16.msra.mxu0 0
        %1821 = vmatprep.subr.bf16.mxu0 0
        %1822 = vmatpush1.bf16.msra.mxu0 0
        %1823 = vmatprep.subr.bf16.mxu0 0
        %1824 = vmatpush1.bf16.msra.mxu0 0
        %1825 = vmatprep.subr.bf16.mxu0 0
        %1826 = vmatpush1.bf16.msra.mxu0 0
        %1827 = vmatprep.subr.bf16.mxu0 0
        %1828 = vmatpush1.bf16.msra.mxu0 0
        %1829 = vmatprep.subr.bf16.mxu0 0
        %1830 = vmatpush1.bf16.msra.mxu0 0
        %1831 = vmatprep.subr.bf16.mxu0 0
        %1832 = vmatpush1.bf16.msra.mxu0 0
        %1833 = vmatprep.subr.bf16.mxu0 0
        %1834 = vmatpush1.bf16.msra.mxu0 0
        %1835 = vmatprep.subr.bf16.mxu0 0
        %1836 = vmatpush1.bf16.msra.mxu0 0
        %1837 = vmatprep.subr.bf16.mxu0 0
        %1838 = vmatpush1.bf16.msra.mxu0 0
        %1839 = vmatprep.subr.bf16.mxu0 0
        %1840 = vmatpush1.bf16.msra.mxu0 0
        %1841 = vmatprep.subr.bf16.mxu0 0
        %1842 = vmatpush1.bf16.msra.mxu0 0
        %1843 = vmatprep.mubr.bf16.mxu0 0
        %1844 = vmatmul.mubr.bf16.gmra.mrb[0].mxu0 %v1806
        %v1845 = vpop.f32.mrb[0].mxu0
        %v1846 = vadd.f32 0.0, %v1845
        %v1847 = vpop.f32.mrb[0].mxu0
        %v1848 = vpop.f32.mrb[0].mxu0
        %v1849 = vpop.f32.mrb[0].mxu0
        %1850 = vdwg.mxu0
        %v1851 = vrcp.pop %v1801
        %v1852 = vmul.f32 %v1846, %v1851
        %1854 = vrot.lane.b32.xlu0 %v1632, 8
        %v1855 = vpop.permute.xlu0 %1854
        %1858 = vrot.lane.b32.xlu0 %v1742, 16
        %v1859 = vpop.permute.xlu0 %1858
        %1862 = vrot.lane.b32.xlu0 %v1852, 24
        %v1863 = vpop.permute.xlu0 %1862
        %v1865 = vsel %vm854, %v1521, %v1855
        %v1866 = vsel %vm901, %v1865, %v1859
        %v1867 = vsel %vm1300, %v1866, %v1863
        %v1868 = vpack.c.bf16 %v1867, %v1867
        %v1870 = vsel %vm655, %v1868, 0
        %1872 = vmatprep.subr.bf16.mxu0 0
        %1873 = vmatpush1.bf16.msra.mxu0 %v1321
        %1874 = vmatprep.subr.bf16.mxu0 0
        %1875 = vmatpush1.bf16.msra.mxu0 %v1322
        %1876 = vmatprep.subr.bf16.mxu0 0
        %1877 = vmatpush1.bf16.msra.mxu0 0
        %1878 = vmatprep.subr.bf16.mxu0 0
        %1879 = vmatpush1.bf16.msra.mxu0 0
        %1880 = vmatprep.subr.bf16.mxu0 0
        %1881 = vmatpush1.bf16.msra.mxu0 0
        %1882 = vmatprep.subr.bf16.mxu0 0
        %1883 = vmatpush1.bf16.msra.mxu0 0
        %1884 = vmatprep.subr.bf16.mxu0 0
        %1885 = vmatpush1.bf16.msra.mxu0 0
        %1886 = vmatprep.subr.bf16.mxu0 0
        %1887 = vmatpush1.bf16.msra.mxu0 0
        %1888 = vmatprep.subr.bf16.mxu0 0
        %1889 = vmatpush1.bf16.msra.mxu0 0
        %1890 = vmatprep.subr.bf16.mxu0 0
        %1891 = vmatpush1.bf16.msra.mxu0 0
        %1892 = vmatprep.subr.bf16.mxu0 0
        %1893 = vmatpush1.bf16.msra.mxu0 0
        %1894 = vmatprep.subr.bf16.mxu0 0
        %1895 = vmatpush1.bf16.msra.mxu0 0
        %1896 = vmatprep.subr.bf16.mxu0 0
        %1897 = vmatpush1.bf16.msra.mxu0 0
        %1898 = vmatprep.subr.bf16.mxu0 0
        %1899 = vmatpush1.bf16.msra.mxu0 0
        %1900 = vmatprep.subr.bf16.mxu0 0
        %1901 = vmatpush1.bf16.msra.mxu0 0
        %1902 = vmatprep.subr.bf16.mxu0 0
        %1903 = vmatpush1.bf16.msra.mxu0 0
        %1904 = vmatprep.mubr.bf16.mxu0 0
        %1905 = vmatmul.mubr.bf16.gmra.mrb[0].mxu0 %v1870
        %v1906 = vpop.f32.mrb[0].mxu0
        %v1907 = vadd.f32 %v1311, %v1906
        %v1908 = vpop.f32.mrb[0].mxu0
        %v1909 = vpop.f32.mrb[0].mxu0
        %v1910 = vpop.f32.mrb[0].mxu0
        %1911 = vdwg.mxu0
        %v1912 = vmul.f32 %v1363, 0.5
        %v1913 = vmul.f32 %v1907, 0.5
        %v1914 = vadd.f32 %v649, %v1912
        %v1915 = vadd.f32 %v650, %v1913
        %v1916 = vld [vmem:[%s10] sm:$0x1]
        %v1917 = vld [vmem:[%s11] sm:$0x1]
        %v1918 = vsel %vm655, %v1914, 0.0
        %1919 = vadd.xlane.f32.xlu0 %v1918
        %v1920 = vpop.xlane.xlu0 %1919
        %v1921 = vsel %vm655, %v1915, 0.0
        %1922 = vadd.xlane.f32.xlu0 %v1921
        %v1923 = vpop.xlane.xlu0 %1922
        %v1924 = vmul.f32 %v1920, %v662
        %v1925 = vmul.f32 %v1923, %v662
        %v1926 = vsub.f32 %v1914, %v1924
        %v1927 = vsub.f32 %v1915, %v1925
        %v1928 = vmul.f32 %v1926, %v1926
        %v1929 = vmul.f32 %v1927, %v1927
        %v1930 = vsel %vm655, %v1928, 0.0
        %1931 = vadd.xlane.f32.xlu0 %v1930
        %v1932 = vpop.xlane.xlu0 %1931
        %v1933 = vsel %vm655, %v1929, 0.0
        %1934 = vadd.xlane.f32.xlu0 %v1933
        %v1935 = vpop.xlane.xlu0 %1934
        %v1936 = vmul.f32 %v1932, %v662
        %v1937 = vmul.f32 %v1935, %v662
        %v1938 = vadd.f32 %v1936, 1e-05
        %v1939 = vadd.f32 %v1937, 1e-05
        %v1940 = vrsqrt.pop %v1938
        %v1941 = vrsqrt.pop %v1939
        %v1942 = vmul.f32 %v1926, %v1940
        %v1943 = vmul.f32 %v1927, %v1941
        %v1945 = vlaneseq
        %v1946 = vshrl.u32 %v1945, 7
        %v1947 = vsub.s32 0, %v1946
        %v1948 = vrot.slane %v1916, %v1947
        %v1950 = vmul.f32 %v1942, %v1948
        %v1951 = vmul.f32 %v1943, %v1948
        %v1953 = vlaneseq
        %v1954 = vshrl.u32 %v1953, 7
        %v1955 = vsub.s32 0, %v1954
        %v1956 = vrot.slane %v1917, %v1955
        %v1958 = vadd.f32 %v1950, %v1956
        %v1959 = vadd.f32 %v1951, %v1956
        %v1960 = vpack.c.bf16 %v1959, %v1958
        %v1961 = vld [vmem:[%s12] sm:$0xf]
        %v1962 = vld [vmem:[%s12 + $0x4] sm:$0xf]
        %v1963 = vld [vmem:[%s12 + $0x8] sm:$0xf]
        %v1964 = vld [vmem:[%s12 + $0xc] sm:$0xf]
        %v1965 = vld [vmem:[%s13] sm:$0x1]
        %v1967 = vlaneseq
        %v1968 = vshrl.u32 %v1967, 7
        %v1969 = vsub.s32 0, %v1968
        %v1970 = vrot.slane %v1965, %v1969
        %v1976 = vunpack.c.l.b16 %v1961
        %v1977 = vunpack.c.l.b16 %v1962
        %v1978 = vunpack.c.l.b16 %v1963
        %v1979 = vunpack.c.l.b16 %v1964
        %v1980 = vpack.c.b16 %v1977, %v1976
        %v1981 = vpack.c.b16 %v1979, %v1978
        %v1985 = vsel %vm655, %v1960, 0
        %1987 = vmatprep.subr.bf16.mxu0 0
        %1988 = vmatpush1.bf16.msra.mxu0 %v1980
        %1989 = vmatprep.subr.bf16.mxu0 0
        %1990 = vmatpush1.bf16.msra.mxu0 %v1981
        %1991 = vmatprep.subr.bf16.mxu0 0
        %1992 = vmatpush1.bf16.msra.mxu0 0
        %1993 = vmatprep.subr.bf16.mxu0 0
        %1994 = vmatpush1.bf16.msra.mxu0 0
        %1995 = vmatprep.subr.bf16.mxu0 0
        %1996 = vmatpush1.bf16.msra.mxu0 0
        %1997 = vmatprep.subr.bf16.mxu0 0
        %1998 = vmatpush1.bf16.msra.mxu0 0
        %1999 = vmatprep.subr.bf16.mxu0 0
        %2000 = vmatpush1.bf16.msra.mxu0 0
        %2001 = vmatprep.subr.bf16.mxu0 0
        %2002 = vmatpush1.bf16.msra.mxu0 0
        %2003 = vmatprep.subr.bf16.mxu0 0
        %2004 = vmatpush1.bf16.msra.mxu0 0
        %2005 = vmatprep.subr.bf16.mxu0 0
        %2006 = vmatpush1.bf16.msra.mxu0 0
        %2007 = vmatprep.subr.bf16.mxu0 0
        %2008 = vmatpush1.bf16.msra.mxu0 0
        %2009 = vmatprep.subr.bf16.mxu0 0
        %2010 = vmatpush1.bf16.msra.mxu0 0
        %2011 = vmatprep.subr.bf16.mxu0 0
        %2012 = vmatpush1.bf16.msra.mxu0 0
        %2013 = vmatprep.subr.bf16.mxu0 0
        %2014 = vmatpush1.bf16.msra.mxu0 0
        %2015 = vmatprep.subr.bf16.mxu0 0
        %2016 = vmatpush1.bf16.msra.mxu0 0
        %2017 = vmatprep.subr.bf16.mxu0 0
        %2018 = vmatpush1.bf16.msra.mxu0 0
        %2019 = vmatprep.mubr.bf16.mxu0 0
        %2020 = vmatmul.mubr.bf16.gmra.mrb[0].mxu0 %v1985
        %v2021 = vpop.f32.mrb[0].mxu0
        %v2022 = vadd.f32 %v1970, %v2021
        %v2023 = vpop.f32.mrb[0].mxu0
        %v2024 = vpop.f32.mrb[0].mxu0
        %v2025 = vadd.f32 %v1970, %v2024
        %v2026 = vpop.f32.mrb[0].mxu0
        %2027 = vdwg.mxu0
        %v2028 = vmul.f32 %v2022, 0.5
        %v2029 = vmul.f32 %v2025, 0.5
        %v2030 = vmul.f32 %v2022, 0.044715
        %v2031 = vmul.f32 %v2025, 0.044715
        %v2032 = vmul.f32 %v2030, %v2022
        %v2033 = vmul.f32 %v2031, %v2025
        %v2034 = vmul.f32 %v2032, %v2022
        %v2035 = vmul.f32 %v2033, %v2025
        %v2036 = vadd.f32 %v2022, %v2034
        %v2037 = vadd.f32 %v2025, %v2035
        %v2038 = vmul.f32 %v2036, 0.7978846
        %v2039 = vmul.f32 %v2037, 0.7978846
        %v2040 = vtanh.pop %v2038
        %v2041 = vtanh.pop %v2039
        %v2042 = vadd.f32 %v2040, 1.0
        %v2043 = vadd.f32 %v2041, 1.0
        %v2044 = vmul.f32 %v2028, %v2042
        %v2045 = vmul.f32 %v2029, %v2043
        %v2046 = vpack.c.bf16 %v2045, %v2044
        %v2047 = vld [vmem:[%s14] sm:$0xf]
        %v2048 = vld [vmem:[%s14 + $0x4] sm:$0xf]
        %v2049 = vld [vmem:[%s14 + $0x8] sm:$0xf]
        %v2050 = vld [vmem:[%s14 + $0xc] sm:$0xf]
        %v2051 = vld [vmem:[%s14 + $0x10] sm:$0xf]
        %v2052 = vld [vmem:[%s14 + $0x14] sm:$0xf]
        %v2053 = vld [vmem:[%s14 + $0x18] sm:$0xf]
        %v2054 = vld [vmem:[%s14 + $0x1c] sm:$0xf]
        %v2055 = vld [vmem:[%s14 + $0x20] sm:$0xf]
        %v2056 = vld [vmem:[%s14 + $0x24] sm:$0xf]
        %v2057 = vld [vmem:[%s14 + $0x28] sm:$0xf]
        %v2058 = vld [vmem:[%s14 + $0x2c] sm:$0xf]
        %v2059 = vld [vmem:[%s14 + $0x30] sm:$0xf]
        %v2060 = vld [vmem:[%s14 + $0x34] sm:$0xf]
        %v2061 = vld [vmem:[%s14 + $0x38] sm:$0xf]
        %v2062 = vld [vmem:[%s14 + $0x3c] sm:$0xf]
        %v2079 = vunpack.c.l.b16 %v2047
        %v2080 = vunpack.c.l.b16 %v2048
        %v2081 = vunpack.c.l.b16 %v2049
        %v2082 = vunpack.c.l.b16 %v2050
        %v2083 = vunpack.c.l.b16 %v2051
        %v2084 = vunpack.c.l.b16 %v2052
        %v2085 = vunpack.c.l.b16 %v2053
        %v2086 = vunpack.c.l.b16 %v2054
        %v2087 = vunpack.c.l.b16 %v2055
        %v2088 = vunpack.c.l.b16 %v2056
        %v2089 = vunpack.c.l.b16 %v2057
        %v2090 = vunpack.c.l.b16 %v2058
        %v2091 = vunpack.c.l.b16 %v2059
        %v2092 = vunpack.c.l.b16 %v2060
        %v2093 = vunpack.c.l.b16 %v2061
        %v2094 = vunpack.c.l.b16 %v2062
        %v2095 = vpack.c.b16 %v2080, %v2079
        %v2096 = vpack.c.b16 %v2082, %v2081
        %v2097 = vpack.c.b16 %v2084, %v2083
        %v2098 = vpack.c.b16 %v2086, %v2085
        %v2099 = vpack.c.b16 %v2088, %v2087
        %v2100 = vpack.c.b16 %v2090, %v2089
        %v2101 = vpack.c.b16 %v2092, %v2091
        %v2102 = vpack.c.b16 %v2094, %v2093
        %2111 = vmatprep.subr.bf16.mxu0 0
        %2112 = vmatpush1.bf16.msra.mxu0 %v2095
        %2113 = vmatprep.subr.bf16.mxu0 0
        %2114 = vmatpush1.bf16.msra.mxu0 %v2096
        %2115 = vmatprep.subr.bf16.mxu0 0
        %2116 = vmatpush1.bf16.msra.mxu0 %v2097
        %2117 = vmatprep.subr.bf16.mxu0 0
        %2118 = vmatpush1.bf16.msra.mxu0 %v2098
        %2119 = vmatprep.subr.bf16.mxu0 0
        %2120 = vmatpush1.bf16.msra.mxu0 %v2099
        %2121 = vmatprep.subr.bf16.mxu0 0
        %2122 = vmatpush1.bf16.msra.mxu0 %v2100
        %2123 = vmatprep.subr.bf16.mxu0 0
        %2124 = vmatpush1.bf16.msra.mxu0 %v2101
        %2125 = vmatprep.subr.bf16.mxu0 0
        %2126 = vmatpush1.bf16.msra.mxu0 %v2102
        %2127 = vmatprep.subr.bf16.mxu0 0
        %2128 = vmatpush1.bf16.msra.mxu0 0
        %2129 = vmatprep.subr.bf16.mxu0 0
        %2130 = vmatpush1.bf16.msra.mxu0 0
        %2131 = vmatprep.subr.bf16.mxu0 0
        %2132 = vmatpush1.bf16.msra.mxu0 0
        %2133 = vmatprep.subr.bf16.mxu0 0
        %2134 = vmatpush1.bf16.msra.mxu0 0
        %2135 = vmatprep.subr.bf16.mxu0 0
        %2136 = vmatpush1.bf16.msra.mxu0 0
        %2137 = vmatprep.subr.bf16.mxu0 0
        %2138 = vmatpush1.bf16.msra.mxu0 0
        %2139 = vmatprep.subr.bf16.mxu0 0
        %2140 = vmatpush1.bf16.msra.mxu0 0
        %2141 = vmatprep.subr.bf16.mxu0 0
        %2142 = vmatpush1.bf16.msra.mxu0 0
        %2143 = vmatprep.mubr.bf16.mxu0 0
        %2144 = vmatmul.mubr.bf16.gmra.mrb[0].mxu0 %v2046
        %v2145 = vpop.f32.mrb[0].mxu0
        %v2146 = vadd.f32 0.0, %v2145
        %v2147 = vpop.f32.mrb[0].mxu0
        %v2148 = vpop.f32.mrb[0].mxu0
        %v2149 = vadd.f32 0.0, %v2148
        %v2150 = vpop.f32.mrb[0].mxu0
        %2151 = vdwg.mxu0
        %v2152 = vadd.f32 %v1914, %v2146
        %v2153 = vadd.f32 %v1915, %v2149
        %v2154 = vld [vmem:[%s15] sm:$0x1]
        %v2156 = vlaneseq
        %v2157 = vshrl.u32 %v2156, 7
        %v2158 = vsub.s32 0, %v2157
        %v2159 = vrot.slane %v2154, %v2158
        %v2161 = vadd.f32 %v2152, %v2159
        %v2162 = vadd.f32 %v2153, %v2159
        %2163 = vst.msk [vmem:[%s624] sm:$0xff] %vm655, %v2161
        %2164 = vst.msk [vmem:[%s631] sm:$0xff] %vm655, %v2162
        %s2165 = sand.u32 %s401, 1
        %s2166 = scalar_lea.sflag [#allocation4], %s2165
        %s2167 = sand.u32 %s401, 1
        %s2168 = smul.addr %s2167, 8
        %s2169 = scalar_lea.vmem [#allocation8], %s2168
        %s2170 = sand.u32 %s427, 1
        %s2171 = scalar_lea.sflag [#allocation10], %s2170
        %s2172 = sand.u32 %s427, 1
        %s2173 = smul.addr %s2172, 8
        %s2174 = scalar_lea.vmem [#allocation9], %s2173
        // Predicated region
        $region97: #{tpu_custom_call.1} parent=83 // pred_check
          %p2175 = pneg %p411
        $region98: #{tpu_custom_call.1} parent=83 // pred_check_branch
          %2177 = sbr.rel (%p2175) target = $region100
        $region99: #{tpu_custom_call.1} parent=83 // pred_region
          %s2179 = ssub.s32 128, 128
          %2180 = vsyncadd %s2166, %s2179
          %s2181 = smul.addr %s37, 128
          %s2182 = scalar_lea.hbm %s16, %s2181
          %s2184 = sshll.u32 %s2169, 4
          %s2185 = int_to_ptr.vmem [resolvable:$true] %s2184
          %2187 = dma.vmem_to_hbm [thread:$0]  %s2185, 128, %s2182, %s2166
        $region100: #{tpu_custom_call.1} parent=83 // pred_fallthru
          _
        // Predicated region
        $region101: #{tpu_custom_call.1} parent=83 // pred_check
          %p2188 = pneg %p437
        $region102: #{tpu_custom_call.1} parent=83 // pred_check_branch
          %2190 = sbr.rel (%p2188) target = $region104
        $region103: #{tpu_custom_call.1} parent=83 // pred_region
          %s2192 = ssub.s32 128, 128
          %2193 = vsyncadd %s2171, %s2192
          %s2194 = smul.addr %s37, 128
          %s2195 = scalar_lea.hbm %s17, %s2194
          %s2197 = sshll.u32 %s2174, 4
          %s2198 = int_to_ptr.vmem [resolvable:$true] %s2197
          %2200 = dma.vmem_to_hbm [thread:$0]  %s2198, 128, %s2195, %s2171
        $region104: #{tpu_custom_call.1} parent=83 // pred_fallthru
          _
      $region84: #{tpu_custom_call.1} parent=5 // pred_fallthru
        _
      %p2201 = scmp.le.s32.totalorder 2, %s32
      // Predicated region
      $region105: #{tpu_custom_call.1} parent=5 // pred_check
        %p2202 = pneg %p2201
      $region106: #{tpu_custom_call.1} parent=5 // pred_check_branch
        %2204 = sbr.rel (%p2202) target = $region108
      $region107: #{tpu_custom_call.1} parent=5 // pred_region
        %s2205 = ssub.s32 %s32, 2
        // Predicated region
        $region109: #{tpu_custom_call.1} parent=107 // pred_check
          %p2206 = pneg %p417
        $region110: #{tpu_custom_call.1} parent=107 // pred_check_branch
          %2208 = sbr.rel (%p2206) target = $region112
        $region111: #{tpu_custom_call.1} parent=107 // pred_region
          %s2209 = sand.u32 %s402, 1
          %s2210 = scalar_lea.sflag [#allocation4], %s2209
          %s2211 = sand.u32 %s402, 1
          %s2212 = smul.addr %s2211, 8
          %s2213 = scalar_lea.vmem [#allocation8], %s2212
          %2214 = dma.done %s2210, 128
        $region112: #{tpu_custom_call.1} parent=107 // pred_fallthru
          _
        // Predicated region
        $region113: #{tpu_custom_call.1} parent=107 // pred_check
          %p2215 = pneg %p443
        $region114: #{tpu_custom_call.1} parent=107 // pred_check_branch
          %2217 = sbr.rel (%p2215) target = $region116
        $region115: #{tpu_custom_call.1} parent=107 // pred_region
          %s2218 = sand.u32 %s428, 1
          %s2219 = scalar_lea.sflag [#allocation10], %s2218
          %s2220 = sand.u32 %s428, 1
          %s2221 = smul.addr %s2220, 8
          %s2222 = scalar_lea.vmem [#allocation9], %s2221
          %2223 = dma.done %s2219, 128
        $region116: #{tpu_custom_call.1} parent=107 // pred_fallthru
          _
      $region108: #{tpu_custom_call.1} parent=5 // pred_fallthru
        _
    $region6: #{tpu_custom_call.1} parent=1 // loop_footer
      %s36 = sadd.s32 1, %s32
    $region7: #{tpu_custom_call.1} parent=1 // loop_footer_branch
      %31 = sbr.rel target = $region3
    $region8: #{tpu_custom_call.1} parent=1 // loop_exit
      _
    %2224 = vsyncpa [#allocation3], 1
    %s2225 = scalar_lea.sflag [#allocation3], 1
    %2226 = vsyncpa %s2225, 1
    %2227 = vsyncpa [#allocation6], 1
    %2228 = vsyncpa [#allocation4], 1
    %s2229 = scalar_lea.sflag [#allocation4], 1
    %2230 = vsyncpa %s2229, 1
    %2231 = vsyncpa [#allocation10], 1
    %s2232 = scalar_lea.sflag [#allocation10], 1
    %2233 = vsyncpa %s2232, 1

</llo_original>
